<compile_context>
chip_gen: v5e
topology: v5e:2x2
jax: 0.10.0
libtpu: 0.0.40
codegen_flags: <defaults>
</compile_context>

<pallas_src>
import functools

import jax
import jax.numpy as jnp
from jax.experimental import pallas as pl
from jax.experimental.pallas import tpu as pltpu


# bf16 inputs to the MXU (f32 accumulation) — ~2x MXU rate and half the DMA
# bytes on v5e/v6e/v7x.  Set to jnp.float32 to restore exact f32 semantics.
MXU_DTYPE = jnp.bfloat16

_VMEM_LIMIT = 32 * 1024 * 1024  # explicit scoped-VMEM budget, safe on all gens


def _round_up(x, m):
    return (x + m - 1) // m * m


# ----------------------------------------------------------------------------
# Pallas kernels
# ----------------------------------------------------------------------------
def _conv_relu_pool_kernel(cols_ref, w_ref, b_ref, o_ref):
    """Fused conv(matmul) + 2x2 max-pool + bias + ReLU.

    cols_ref: (4, Kp, TM)  4 pool-window quadrants, Kp = padded C*KH*KW,
                           TM = lane-dense tile of pooled output pixels (bf16).
    w_ref:    (OC, Kp)     flattened, zero-padded conv weights (bf16).
    b_ref:    (OC, 1)      bias, f32 (added after accumulation).
    o_ref:    (OC, TM)     channel-major output, pixels on the lane axis (f32).
    """
    w = w_ref[...]
    # Static unroll over the 4 pixels of each 2x2 pool window; pool is a max
    # over the four matmul results.  Bias + ReLU hoisted out of the loop.
    acc = jnp.dot(w, cols_ref[0], preferred_element_type=jnp.float32)
    for q in range(1, 4):
        acc = jnp.maximum(
            acc, jnp.dot(w, cols_ref[q], preferred_element_type=jnp.float32))
    o_ref[...] = jnp.maximum(acc + b_ref[...], 0.0)


def _mlp_kernel(x_ref, w1_ref, b1_ref, w2_ref, b2_ref, w3_ref, b3_ref, o_ref,
                *, mxu_dtype):
    """Fused fc1 -> ReLU -> fc2 -> ReLU -> fc3 (all intermediates in VMEM)."""
    h = jnp.dot(x_ref[...].astype(mxu_dtype), w1_ref[...],
                preferred_element_type=jnp.float32) + b1_ref[...]
    h = jnp.maximum(h, 0.0)
    h = jnp.dot(h.astype(mxu_dtype), w2_ref[...],
                preferred_element_type=jnp.float32) + b2_ref[...]
    h = jnp.maximum(h, 0.0)
    y = jnp.dot(h.astype(mxu_dtype), w3_ref[...],
                preferred_element_type=jnp.float32) + b3_ref[...]
    o_ref[...] = y


# ----------------------------------------------------------------------------
# conv + relu + 2x2 max-pool  (channel-major, XLA im2col glue + Pallas kernel)
# ----------------------------------------------------------------------------
def _im2col_pool_quadrants_cm(x, kh, kw):
    """x is channel-major (C, B, H, W).

    cols[q, c*kh*kw + i*kw + j, b*PH*PW + ph*PW + pw]
       = x[c, b, 2*ph + qh + i, 2*pw + qw + j],  q = 2*qh + qw.
    """
    C, B, H, W = x.shape
    OH, OW = H - kh + 1, W - kw + 1
    PH, PW = OH // 2, OW // 2
    patches = jnp.stack(
        [jnp.stack([x[:, :, i:i + OH, j:j + OW] for j in range(kw)], axis=2)
         for i in range(kh)],
        axis=2)                                   # (C, B, kh, kw, OH, OW)
    patches = patches[:, :, :, :, :2 * PH, :2 * PW]
    patches = patches.reshape(C, B, kh, kw, PH, 2, PW, 2)
    # dims (c, b, i, j, ph, qh, pw, qw) -> (qh, qw, c, i, j, b, ph, pw)
    patches = jnp.transpose(patches, (5, 7, 0, 2, 3, 1, 4, 6))
    cols = patches.reshape(4, C * kh * kw, B * PH * PW)
    return cols, PH, PW


def conv_relu_pool_cm(x_cm, w2d, b2d, kh, kw):
    """x_cm: (C, B, H, W) f32; w2d: (OC, Kp) bf16; b2d: (OC, 1) f32.

    Returns channel-major (OC, B, PH, PW) f32 (no NCHW round trip).
    """
    C, B, H, W = x_cm.shape
    OC, Kp = w2d.shape
    cols, PH, PW = _im2col_pool_quadrants_cm(x_cm, kh, kw)   # (4, K, M)
    K, M = cols.shape[1], cols.shape[2]
    assert Kp == _round_up(K, 128), (Kp, K)

    # Lane-dense M tile: large (amortizes per-step overhead) but sized so the
    # parallel grid has >= 2 steps whenever M allows it (v7x megacore).
    TM = min(1024, max(128, _round_up(pl.cdiv(M, 2), 128)))
    Mp = _round_up(M, TM)
    cols = cols.astype(MXU_DTYPE)                            # halve DMA bytes
    cols = jnp.pad(cols, ((0, 0), (0, Kp - K), (0, Mp - M)))

    y = pl.pallas_call(
        _conv_relu_pool_kernel,
        out_shape=jax.ShapeDtypeStruct((OC, Mp), jnp.float32),
        grid=(Mp // TM,),
        in_specs=[
            pl.BlockSpec((4, Kp, TM), lambda m: (0, 0, m)),  # pixel tiles
            pl.BlockSpec((OC, Kp), lambda m: (0, 0)),        # weights resident
            pl.BlockSpec((OC, 1), lambda m: (0, 0)),         # bias resident
        ],
        out_specs=pl.BlockSpec((OC, TM), lambda m: (0, m)),
        compiler_params=pltpu.CompilerParams(
            dimension_semantics=("parallel",),               # megacore split
            vmem_limit_bytes=_VMEM_LIMIT),
    )(cols, w2d, b2d)

    # Slice off the padded-M junk (relu(bias)) before anyone consumes it.
    return y[:, :M].reshape(OC, B, PH, PW)


# ----------------------------------------------------------------------------
# Fused fully-connected stack
# ----------------------------------------------------------------------------
def mlp_forward(x, w1, b1, w2, b2, w3, b3):
    """x: (B, F) f32. Weights pre-transposed, zero-padded, bf16 (prepare_params).

    fc3 output is padded to 128 lanes (lane-dense store); real logits are the
    first 10 columns.
    """
    B, F = x.shape
    K1, H1 = w1.shape
    H2 = w2.shape[1]
    NOp = w3.shape[1]                                   # 128 (padded from 10)
    TB = min(256, max(8, _round_up(pl.cdiv(B, 2), 8)))  # >=2 grid steps if B>=16
    Bp = _round_up(B, TB)
    xp = jnp.pad(x, ((0, Bp - B), (0, K1 - F)))

    out = pl.pallas_call(
        functools.partial(_mlp_kernel, mxu_dtype=MXU_DTYPE),
        out_shape=jax.ShapeDtypeStruct((Bp, NOp), jnp.float32),
        grid=(Bp // TB,),
        in_specs=[
            pl.BlockSpec((TB, K1), lambda i: (i, 0)),
            pl.BlockSpec((K1, H1), lambda i: (0, 0)),
            pl.BlockSpec((1, H1), lambda i: (0, 0)),
            pl.BlockSpec((H1, H2), lambda i: (0, 0)),
            pl.BlockSpec((1, H2), lambda i: (0, 0)),
            pl.BlockSpec((H2, NOp), lambda i: (0, 0)),
            pl.BlockSpec((1, NOp), lambda i: (0, 0)),
        ],
        out_specs=pl.BlockSpec((TB, NOp), lambda i: (i, 0)),
        compiler_params=pltpu.CompilerParams(
            dimension_semantics=("parallel",),
            vmem_limit_bytes=_VMEM_LIMIT),
    )(xp, w1, b1, w2, b2, w3, b3)
    return out[:B, :10]


# ----------------------------------------------------------------------------
# Parameter init (PyTorch-style uniform) and one-time weight preparation
# ----------------------------------------------------------------------------
def init_params(key):
    def uniform(key, shape, fan_in):
        bound = 1.0 / jnp.sqrt(fan_in)
        return jax.random.uniform(key, shape, jnp.float32, -bound, bound)

    ks = jax.random.split(key, 10)
    p = {}
    p["conv1_w"] = uniform(ks[0], (6, 3, 5, 5), 3 * 5 * 5)
    p["conv1_b"] = uniform(ks[1], (6,), 3 * 5 * 5)
    p["conv2_w"] = uniform(ks[2], (16, 6, 5, 5), 6 * 5 * 5)
    p["conv2_b"] = uniform(ks[3], (16,), 6 * 5 * 5)
    p["fc1_w"] = uniform(ks[4], (120, 16 * 5 * 5), 16 * 5 * 5)
    p["fc1_b"] = uniform(ks[5], (120,), 16 * 5 * 5)
    p["fc2_w"] = uniform(ks[6], (84, 120), 120)
    p["fc2_b"] = uniform(ks[7], (84,), 120)
    p["fc3_w"] = uniform(ks[8], (10, 84), 84)
    p["fc3_b"] = uniform(ks[9], (10,), 84)
    return p


def prepare_params(p):
    """One-time (outside jit) reshape / transpose / zero-pad / bf16-cast.

    conv1 OC is padded 6->8 (zero rows) and conv2's weights are laid out for
    the resulting 8-channel input, so all conv output blocks are 8-sublane
    aligned.  fc outputs are padded to 128 lanes.  All padding is with zeros,
    so the real outputs are numerically unchanged (modulo the bf16 input cast).
    """
    def pad_to(a, shape):
        return jnp.pad(a, [(0, s - d) for d, s in zip(a.shape, shape)])

    K1 = 3 * 5 * 5                       # 75
    K2 = 8 * 5 * 5                       # 200 (8-channel padded conv1 output)
    K1p, K2p = _round_up(K1, 128), _round_up(K2, 128)     # 128, 256
    Fp = _round_up(16 * 5 * 5, 128)      # 512
    H1p, H2p, NOp = 128, 128, 128

    q = {}
    w1 = pad_to(p["conv1_w"], (8, 3, 5, 5)).reshape(8, K1)
    q["conv1_w"] = pad_to(w1, (8, K1p)).astype(MXU_DTYPE)
    q["conv1_b"] = pad_to(p["conv1_b"], (8,)).reshape(8, 1)          # f32
    w2 = pad_to(p["conv2_w"], (16, 8, 5, 5)).reshape(16, K2)
    q["conv2_w"] = pad_to(w2, (16, K2p)).astype(MXU_DTYPE)
    q["conv2_b"] = p["conv2_b"].reshape(16, 1)                       # f32
    q["fc1_w"] = pad_to(p["fc1_w"].T, (Fp, H1p)).astype(MXU_DTYPE)   # (512,128)
    q["fc1_b"] = pad_to(p["fc1_b"].reshape(1, 120), (1, H1p))
    q["fc2_w"] = pad_to(p["fc2_w"].T, (H1p, H2p)).astype(MXU_DTYPE)  # (128,128)
    q["fc2_b"] = pad_to(p["fc2_b"].reshape(1, 84), (1, H2p))
    q["fc3_w"] = pad_to(p["fc3_w"].T, (H2p, NOp)).astype(MXU_DTYPE)  # (128,128)
    q["fc3_b"] = pad_to(p["fc3_b"].reshape(1, 10), (1, NOp))
    return q


# ----------------------------------------------------------------------------
# Forward pass (mirrors torch CNN.forward)
# ----------------------------------------------------------------------------
@jax.jit
def cnn_forward(params, x):
    # x: (N, 3, 32, 32) f32
    N = x.shape[0]
    x_cm = jnp.transpose(x, (1, 0, 2, 3))                        # (3, N, 32, 32)
    x_cm = conv_relu_pool_cm(x_cm, params["conv1_w"], params["conv1_b"], 5, 5)
    #        -> (8, N, 14, 14)   channel-major, channels 6..7 are zero
    x_cm = conv_relu_pool_cm(x_cm, params["conv2_w"], params["conv2_b"], 5, 5)
    #        -> (16, N, 5, 5)
    # Restore PyTorch's per-sample C*H*W flatten order at the fc1 boundary.
    feat = jnp.transpose(x_cm, (1, 0, 2, 3)).reshape(N, 16 * 5 * 5)
    return mlp_forward(feat, params["fc1_w"], params["fc1_b"],
                       params["fc2_w"], params["fc2_b"],
                       params["fc3_w"], params["fc3_b"])          # (N, 10)


if __name__ == "__main__":
    key = jax.random.PRNGKey(0)
    pkey, xkey = jax.random.split(key)
    raw_params = init_params(pkey)
    params = prepare_params(raw_params)   # weight prep hoisted out of the jit
    # fc1 expects 16*5*5 features -> 32x32 spatial input (as in the torch spec).
    x = jax.random.normal(xkey, (2, 3, 32, 32), dtype=jnp.float32)
    out = cnn_forward(params, x)
    out = jax.block_until_ready(out)
    assert out.shape == (2, 10), out.shape
    print("KERNEL_OK")
</pallas_src>

<mosaic_0001>
module attributes {stable_mosaic.version = 11 : i64} {
  func.func @_conv_relu_pool_kernel(%arg0: i32, %arg1: memref<4x128x256xbf16, #tpu.memory_space<vmem>>, %arg2: memref<8x128xbf16, #tpu.memory_space<vmem>>, %arg3: memref<8x1xf32, #tpu.memory_space<vmem>>, %arg4: memref<8x256xf32, #tpu.memory_space<vmem>>) attributes {dimension_semantics = [#tpu.dimension_semantics<parallel>], iteration_bounds = array<i64: 2>, scalar_prefetch = 0 : i64, scratch_operands = 0 : i64, tpu.core_type = #tpu.core_type<tc>, window_params = [{transform_indices = @transform_0, window_bounds = array<i64: 4, 128, 256>}, {pipeline_mode = #tpu.pipeline_mode<synchronous>, transform_indices = @transform_1, window_bounds = array<i64: 8, 128>}, {pipeline_mode = #tpu.pipeline_mode<synchronous>, transform_indices = @transform_2, window_bounds = array<i64: 8, 1>}, {transform_indices = @transform_3, window_bounds = array<i64: 8, 256>}]} {
    %c0 = arith.constant 0 : index
    %c0_0 = arith.constant 0 : index
    %0 = vector.load %arg2[%c0, %c0_0] : memref<8x128xbf16, #tpu.memory_space<vmem>>, vector<8x128xbf16>
    %c0_1 = arith.constant 0 : index
    %c0_2 = arith.constant 0 : index
    %c0_3 = arith.constant 0 : index
    %1 = vector.load %arg1[%c0_1, %c0_2, %c0_3] : memref<4x128x256xbf16, #tpu.memory_space<vmem>>, vector<1x128x256xbf16>
    %2 = vector.shape_cast %1 : vector<1x128x256xbf16> to vector<128x256xbf16>
    %cst = arith.constant dense<0.000000e+00> : vector<8x256xf32>
    %3 = tpu.matmul %0, %2, %cst {dimension_numbers = #tpu.dot_dimension_numbers<[1], [0], [0], [1], [0, 0, 1, 1], [], []>} : vector<8x128xbf16>, vector<128x256xbf16>, vector<8x256xf32> -> vector<8x256xf32>
    %c1 = arith.constant 1 : index
    %c0_4 = arith.constant 0 : index
    %c0_5 = arith.constant 0 : index
    %4 = vector.load %arg1[%c1, %c0_4, %c0_5] : memref<4x128x256xbf16, #tpu.memory_space<vmem>>, vector<1x128x256xbf16>
    %5 = vector.shape_cast %4 : vector<1x128x256xbf16> to vector<128x256xbf16>
    %cst_6 = arith.constant dense<0.000000e+00> : vector<8x256xf32>
    %6 = tpu.matmul %0, %5, %cst_6 {dimension_numbers = #tpu.dot_dimension_numbers<[1], [0], [0], [1], [0, 0, 1, 1], [], []>} : vector<8x128xbf16>, vector<128x256xbf16>, vector<8x256xf32> -> vector<8x256xf32>
    %7 = arith.maximumf %3, %6 : vector<8x256xf32>
    %c2 = arith.constant 2 : index
    %c0_7 = arith.constant 0 : index
    %c0_8 = arith.constant 0 : index
    %8 = vector.load %arg1[%c2, %c0_7, %c0_8] : memref<4x128x256xbf16, #tpu.memory_space<vmem>>, vector<1x128x256xbf16>
    %9 = vector.shape_cast %8 : vector<1x128x256xbf16> to vector<128x256xbf16>
    %cst_9 = arith.constant dense<0.000000e+00> : vector<8x256xf32>
    %10 = tpu.matmul %0, %9, %cst_9 {dimension_numbers = #tpu.dot_dimension_numbers<[1], [0], [0], [1], [0, 0, 1, 1], [], []>} : vector<8x128xbf16>, vector<128x256xbf16>, vector<8x256xf32> -> vector<8x256xf32>
    %11 = arith.maximumf %7, %10 : vector<8x256xf32>
    %c3 = arith.constant 3 : index
    %c0_10 = arith.constant 0 : index
    %c0_11 = arith.constant 0 : index
    %12 = vector.load %arg1[%c3, %c0_10, %c0_11] : memref<4x128x256xbf16, #tpu.memory_space<vmem>>, vector<1x128x256xbf16>
    %13 = vector.shape_cast %12 : vector<1x128x256xbf16> to vector<128x256xbf16>
    %cst_12 = arith.constant dense<0.000000e+00> : vector<8x256xf32>
    %14 = tpu.matmul %0, %13, %cst_12 {dimension_numbers = #tpu.dot_dimension_numbers<[1], [0], [0], [1], [0, 0, 1, 1], [], []>} : vector<8x128xbf16>, vector<128x256xbf16>, vector<8x256xf32> -> vector<8x256xf32>
    %15 = arith.maximumf %11, %14 : vector<8x256xf32>
    %c0_13 = arith.constant 0 : index
    %c0_14 = arith.constant 0 : index
    %16 = vector.load %arg3[%c0_13, %c0_14] : memref<8x1xf32, #tpu.memory_space<vmem>>, vector<8x1xf32>
    %17 = vector.broadcast %16 : vector<8x1xf32> to vector<8x256xf32>
    %18 = arith.addf %15, %17 : vector<8x256xf32>
    %cst_15 = arith.constant 0.000000e+00 : f32
    %19 = vector.broadcast %cst_15 : f32 to vector<8x256xf32>
    %20 = arith.maximumf %18, %19 : vector<8x256xf32>
    %c0_16 = arith.constant 0 : index
    %c0_17 = arith.constant 0 : index
    %21 = vector.load %arg4[%c0_16, %c0_17] : memref<8x256xf32, #tpu.memory_space<vmem>>, vector<8x256xf32>
    tpu.vector_store %arg4[%c0_16, %c0_17], %20 {strides = array<i32>} : memref<8x256xf32, #tpu.memory_space<vmem>>, vector<8x256xf32>,
    return
  }
  func.func @transform_0(%arg0: i32) -> (i32, i32, i32) {
    %c0_i32 = arith.constant 0 : i32
    %c0_i32_0 = arith.constant 0 : i32
    %c0_i32_1 = arith.constant 0 : i32
    return %c0_i32, %c0_i32_0, %arg0 : i32, i32, i32
  }
  func.func @transform_1(%arg0: i32) -> (i32, i32) {
    %c0_i32 = arith.constant 0 : i32
    %c0_i32_0 = arith.constant 0 : i32
    %c0_i32_1 = arith.constant 0 : i32
    return %c0_i32, %c0_i32_0 : i32, i32
  }
  func.func @transform_2(%arg0: i32) -> (i32, i32) {
    %c0_i32 = arith.constant 0 : i32
    %c0_i32_0 = arith.constant 0 : i32
    %c0_i32_1 = arith.constant 0 : i32
    return %c0_i32, %c0_i32_0 : i32, i32
  }
  func.func @transform_3(%arg0: i32) -> (i32, i32) {
    %c0_i32 = arith.constant 0 : i32
    %c0_i32_0 = arith.constant 0 : i32
    return %c0_i32, %arg0 : i32, i32
  }
}

module attributes {stable_mosaic.version = 11 : i64} {
  func.func @_conv_relu_pool_kernel(%arg0: i32, %arg1: memref<4x256x128xbf16, #tpu.memory_space<vmem>>, %arg2: memref<16x256xbf16, #tpu.memory_space<vmem>>, %arg3: memref<16x1xf32, #tpu.memory_space<vmem>>, %arg4: memref<16x128xf32, #tpu.memory_space<vmem>>) attributes {dimension_semantics = [#tpu.dimension_semantics<parallel>], iteration_bounds = array<i64: 1>, scalar_prefetch = 0 : i64, scratch_operands = 0 : i64, tpu.core_type = #tpu.core_type<tc>, window_params = [{transform_indices = @transform_0, window_bounds = array<i64: 4, 256, 128>}, {pipeline_mode = #tpu.pipeline_mode<synchronous>, transform_indices = @transform_1, window_bounds = array<i64: 16, 256>}, {pipeline_mode = #tpu.pipeline_mode<synchronous>, transform_indices = @transform_2, window_bounds = array<i64: 16, 1>}, {transform_indices = @transform_3, window_bounds = array<i64: 16, 128>}]} {
    %c0 = arith.constant 0 : index
    %c0_0 = arith.constant 0 : index
    %0 = vector.load %arg2[%c0, %c0_0] : memref<16x256xbf16, #tpu.memory_space<vmem>>, vector<16x256xbf16>
    %c0_1 = arith.constant 0 : index
    %c0_2 = arith.constant 0 : index
    %c0_3 = arith.constant 0 : index
    %1 = vector.load %arg1[%c0_1, %c0_2, %c0_3] : memref<4x256x128xbf16, #tpu.memory_space<vmem>>, vector<1x256x128xbf16>
    %2 = vector.shape_cast %1 : vector<1x256x128xbf16> to vector<256x128xbf16>
    %cst = arith.constant dense<0.000000e+00> : vector<16x128xf32>
    %3 = tpu.matmul %0, %2, %cst {dimension_numbers = #tpu.dot_dimension_numbers<[1], [0], [0], [1], [0, 0, 1, 1], [], []>} : vector<16x256xbf16>, vector<256x128xbf16>, vector<16x128xf32> -> vector<16x128xf32>
    %c1 = arith.constant 1 : index
    %c0_4 = arith.constant 0 : index
    %c0_5 = arith.constant 0 : index
    %4 = vector.load %arg1[%c1, %c0_4, %c0_5] : memref<4x256x128xbf16, #tpu.memory_space<vmem>>, vector<1x256x128xbf16>
    %5 = vector.shape_cast %4 : vector<1x256x128xbf16> to vector<256x128xbf16>
    %cst_6 = arith.constant dense<0.000000e+00> : vector<16x128xf32>
    %6 = tpu.matmul %0, %5, %cst_6 {dimension_numbers = #tpu.dot_dimension_numbers<[1], [0], [0], [1], [0, 0, 1, 1], [], []>} : vector<16x256xbf16>, vector<256x128xbf16>, vector<16x128xf32> -> vector<16x128xf32>
    %7 = arith.maximumf %3, %6 : vector<16x128xf32>
    %c2 = arith.constant 2 : index
    %c0_7 = arith.constant 0 : index
    %c0_8 = arith.constant 0 : index
    %8 = vector.load %arg1[%c2, %c0_7, %c0_8] : memref<4x256x128xbf16, #tpu.memory_space<vmem>>, vector<1x256x128xbf16>
    %9 = vector.shape_cast %8 : vector<1x256x128xbf16> to vector<256x128xbf16>
    %cst_9 = arith.constant dense<0.000000e+00> : vector<16x128xf32>
    %10 = tpu.matmul %0, %9, %cst_9 {dimension_numbers = #tpu.dot_dimension_numbers<[1], [0], [0], [1], [0, 0, 1, 1], [], []>} : vector<16x256xbf16>, vector<256x128xbf16>, vector<16x128xf32> -> vector<16x128xf32>
    %11 = arith.maximumf %7, %10 : vector<16x128xf32>
    %c3 = arith.constant 3 : index
    %c0_10 = arith.constant 0 : index
    %c0_11 = arith.constant 0 : index
    %12 = vector.load %arg1[%c3, %c0_10, %c0_11] : memref<4x256x128xbf16, #tpu.memory_space<vmem>>, vector<1x256x128xbf16>
    %13 = vector.shape_cast %12 : vector<1x256x128xbf16> to vector<256x128xbf16>
    %cst_12 = arith.constant dense<0.000000e+00> : vector<16x128xf32>
    %14 = tpu.matmul %0, %13, %cst_12 {dimension_numbers = #tpu.dot_dimension_numbers<[1], [0], [0], [1], [0, 0, 1, 1], [], []>} : vector<16x256xbf16>, vector<256x128xbf16>, vector<16x128xf32> -> vector<16x128xf32>
    %15 = arith.maximumf %11, %14 : vector<16x128xf32>
    %c0_13 = arith.constant 0 : index
    %c0_14 = arith.constant 0 : index
    %16 = vector.load %arg3[%c0_13, %c0_14] : memref<16x1xf32, #tpu.memory_space<vmem>>, vector<16x1xf32>
    %17 = vector.broadcast %16 : vector<16x1xf32> to vector<16x128xf32>
    %18 = arith.addf %15, %17 : vector<16x128xf32>
    %cst_15 = arith.constant 0.000000e+00 : f32
    %19 = vector.broadcast %cst_15 : f32 to vector<16x128xf32>
    %20 = arith.maximumf %18, %19 : vector<16x128xf32>
    %c0_16 = arith.constant 0 : index
    %c0_17 = arith.constant 0 : index
    %21 = vector.load %arg4[%c0_16, %c0_17] : memref<16x128xf32, #tpu.memory_space<vmem>>, vector<16x128xf32>
    tpu.vector_store %arg4[%c0_16, %c0_17], %20 {strides = array<i32>} : memref<16x128xf32, #tpu.memory_space<vmem>>, vector<16x128xf32>,
    return
  }
  func.func @transform_0(%arg0: i32) -> (i32, i32, i32) {
    %c0_i32 = arith.constant 0 : i32
    %c0_i32_0 = arith.constant 0 : i32
    %c0_i32_1 = arith.constant 0 : i32
    return %c0_i32, %c0_i32_0, %arg0 : i32, i32, i32
  }
  func.func @transform_1(%arg0: i32) -> (i32, i32) {
    %c0_i32 = arith.constant 0 : i32
    %c0_i32_0 = arith.constant 0 : i32
    %c0_i32_1 = arith.constant 0 : i32
    return %c0_i32, %c0_i32_0 : i32, i32
  }
  func.func @transform_2(%arg0: i32) -> (i32, i32) {
    %c0_i32 = arith.constant 0 : i32
    %c0_i32_0 = arith.constant 0 : i32
    %c0_i32_1 = arith.constant 0 : i32
    return %c0_i32, %c0_i32_0 : i32, i32
  }
  func.func @transform_3(%arg0: i32) -> (i32, i32) {
    %c0_i32 = arith.constant 0 : i32
    %c0_i32_0 = arith.constant 0 : i32
    return %c0_i32, %arg0 : i32, i32
  }
}

module attributes {stable_mosaic.version = 11 : i64} {
  func.func @_mlp_kernel(%arg0: i32, %arg1: memref<8x512xf32, #tpu.memory_space<vmem>>, %arg2: memref<512x128xbf16, #tpu.memory_space<vmem>>, %arg3: memref<1x128xf32, #tpu.memory_space<vmem>>, %arg4: memref<128x128xbf16, #tpu.memory_space<vmem>>, %arg5: memref<1x128xf32, #tpu.memory_space<vmem>>, %arg6: memref<128x128xbf16, #tpu.memory_space<vmem>>, %arg7: memref<1x128xf32, #tpu.memory_space<vmem>>, %arg8: memref<8x128xf32, #tpu.memory_space<vmem>>) attributes {dimension_semantics = [#tpu.dimension_semantics<parallel>], iteration_bounds = array<i64: 1>, scalar_prefetch = 0 : i64, scratch_operands = 0 : i64, tpu.core_type = #tpu.core_type<tc>, window_params = [{transform_indices = @transform_0, window_bounds = array<i64: 8, 512>}, {pipeline_mode = #tpu.pipeline_mode<synchronous>, transform_indices = @transform_1, window_bounds = array<i64: 512, 128>}, {pipeline_mode = #tpu.pipeline_mode<synchronous>, transform_indices = @transform_2, window_bounds = array<i64: 1, 128>}, {pipeline_mode = #tpu.pipeline_mode<synchronous>, transform_indices = @transform_3, window_bounds = array<i64: 128, 128>}, {pipeline_mode = #tpu.pipeline_mode<synchronous>, transform_indices = @transform_4, window_bounds = array<i64: 1, 128>}, {pipeline_mode = #tpu.pipeline_mode<synchronous>, transform_indices = @transform_5, window_bounds = array<i64: 128, 128>}, {pipeline_mode = #tpu.pipeline_mode<synchronous>, transform_indices = @transform_6, window_bounds = array<i64: 1, 128>}, {transform_indices = @transform_7, window_bounds = array<i64: 8, 128>}]} {
    %c0 = arith.constant 0 : index
    %c0_0 = arith.constant 0 : index
    %0 = vector.load %arg1[%c0, %c0_0] : memref<8x512xf32, #tpu.memory_space<vmem>>, vector<8x512xf32>
    %1 = arith.truncf %0 : vector<8x512xf32> to vector<8x512xbf16>
    %c0_1 = arith.constant 0 : index
    %c0_2 = arith.constant 0 : index
    %2 = vector.load %arg2[%c0_1, %c0_2] : memref<512x128xbf16, #tpu.memory_space<vmem>>, vector<512x128xbf16>
    %cst = arith.constant dense<0.000000e+00> : vector<8x128xf32>
    %3 = tpu.matmul %1, %2, %cst {dimension_numbers = #tpu.dot_dimension_numbers<[1], [0], [0], [1], [0, 0, 1, 1], [], []>} : vector<8x512xbf16>, vector<512x128xbf16>, vector<8x128xf32> -> vector<8x128xf32>
    %c0_3 = arith.constant 0 : index
    %c0_4 = arith.constant 0 : index
    %4 = vector.load %arg3[%c0_3, %c0_4] : memref<1x128xf32, #tpu.memory_space<vmem>>, vector<1x128xf32>
    %5 = vector.broadcast %4 : vector<1x128xf32> to vector<8x128xf32>
    %6 = arith.addf %3, %5 : vector<8x128xf32>
    %cst_5 = arith.constant 0.000000e+00 : f32
    %7 = vector.broadcast %cst_5 : f32 to vector<8x128xf32>
    %8 = arith.maximumf %6, %7 : vector<8x128xf32>
    %9 = arith.truncf %8 : vector<8x128xf32> to vector<8x128xbf16>
    %c0_6 = arith.constant 0 : index
    %c0_7 = arith.constant 0 : index
    %10 = vector.load %arg4[%c0_6, %c0_7] : memref<128x128xbf16, #tpu.memory_space<vmem>>, vector<128x128xbf16>
    %cst_8 = arith.constant dense<0.000000e+00> : vector<8x128xf32>
    %11 = tpu.matmul %9, %10, %cst_8 {dimension_numbers = #tpu.dot_dimension_numbers<[1], [0], [0], [1], [0, 0, 1, 1], [], []>} : vector<8x128xbf16>, vector<128x128xbf16>, vector<8x128xf32> -> vector<8x128xf32>
    %c0_9 = arith.constant 0 : index
    %c0_10 = arith.constant 0 : index
    %12 = vector.load %arg5[%c0_9, %c0_10] : memref<1x128xf32, #tpu.memory_space<vmem>>, vector<1x128xf32>
    %13 = vector.broadcast %12 : vector<1x128xf32> to vector<8x128xf32>
    %14 = arith.addf %11, %13 : vector<8x128xf32>
    %cst_11 = arith.constant 0.000000e+00 : f32
    %15 = vector.broadcast %cst_11 : f32 to vector<8x128xf32>
    %16 = arith.maximumf %14, %15 : vector<8x128xf32>
    %17 = arith.truncf %16 : vector<8x128xf32> to vector<8x128xbf16>
    %c0_12 = arith.constant 0 : index
    %c0_13 = arith.constant 0 : index
    %18 = vector.load %arg6[%c0_12, %c0_13] : memref<128x128xbf16, #tpu.memory_space<vmem>>, vector<128x128xbf16>
    %cst_14 = arith.constant dense<0.000000e+00> : vector<8x128xf32>
    %19 = tpu.matmul %17, %18, %cst_14 {dimension_numbers = #tpu.dot_dimension_numbers<[1], [0], [0], [1], [0, 0, 1, 1], [], []>} : vector<8x128xbf16>, vector<128x128xbf16>, vector<8x128xf32> -> vector<8x128xf32>
    %c0_15 = arith.constant 0 : index
    %c0_16 = arith.constant 0 : index
    %20 = vector.load %arg7[%c0_15, %c0_16] : memref<1x128xf32, #tpu.memory_space<vmem>>, vector<1x128xf32>
    %21 = vector.broadcast %20 : vector<1x128xf32> to vector<8x128xf32>
    %22 = arith.addf %19, %21 : vector<8x128xf32>
    %c0_17 = arith.constant 0 : index
    %c0_18 = arith.constant 0 : index
    %23 = vector.load %arg8[%c0_17, %c0_18] : memref<8x128xf32, #tpu.memory_space<vmem>>, vector<8x128xf32>
    tpu.vector_store %arg8[%c0_17, %c0_18], %22 {strides = array<i32>} : memref<8x128xf32, #tpu.memory_space<vmem>>, vector<8x128xf32>,
    return
  }
  func.func @transform_0(%arg0: i32) -> (i32, i32) {
    %c0_i32 = arith.constant 0 : i32
    %c0_i32_0 = arith.constant 0 : i32
    return %arg0, %c0_i32 : i32, i32
  }
  func.func @transform_1(%arg0: i32) -> (i32, i32) {
    %c0_i32 = arith.constant 0 : i32
    %c0_i32_0 = arith.constant 0 : i32
    %c0_i32_1 = arith.constant 0 : i32
    return %c0_i32, %c0_i32_0 : i32, i32
  }
  func.func @transform_2(%arg0: i32) -> (i32, i32) {
    %c0_i32 = arith.constant 0 : i32
    %c0_i32_0 = arith.constant 0 : i32
    %c0_i32_1 = arith.constant 0 : i32
    return %c0_i32, %c0_i32_0 : i32, i32
  }
  func.func @transform_3(%arg0: i32) -> (i32, i32) {
    %c0_i32 = arith.constant 0 : i32
    %c0_i32_0 = arith.constant 0 : i32
    %c0_i32_1 = arith.constant 0 : i32
    return %c0_i32, %c0_i32_0 : i32, i32
  }
  func.func @transform_4(%arg0: i32) -> (i32, i32) {
    %c0_i32 = arith.constant 0 : i32
    %c0_i32_0 = arith.constant 0 : i32
    %c0_i32_1 = arith.constant 0 : i32
    return %c0_i32, %c0_i32_0 : i32, i32
  }
  func.func @transform_5(%arg0: i32) -> (i32, i32) {
    %c0_i32 = arith.constant 0 : i32
    %c0_i32_0 = arith.constant 0 : i32
    %c0_i32_1 = arith.constant 0 : i32
    return %c0_i32, %c0_i32_0 : i32, i32
  }
  func.func @transform_6(%arg0: i32) -> (i32, i32) {
    %c0_i32 = arith.constant 0 : i32
    %c0_i32_0 = arith.constant 0 : i32
    %c0_i32_1 = arith.constant 0 : i32
    return %c0_i32, %c0_i32_0 : i32, i32
  }
  func.func @transform_7(%arg0: i32) -> (i32, i32) {
    %c0_i32 = arith.constant 0 : i32
    %c0_i32_0 = arith.constant 0 : i32
    return %arg0, %c0_i32 : i32, i32
  }
}

</mosaic_0001>

<llo_original>
// kernel: cnn_forward.3
$region0: #{cnn_forward.3}
  #allocation0 [shape = 'u32[]', space=smem, size = 0x4, offset = 0x4, fixed_abs, tag = 'smem constant byte address 0x4 - core index']
  #allocation1 [shape = 'u32[72,128]{1,0:T(1,128)}', space=vmem, size = 0x9000, scoped, tag = 'internal scratch']
  %s0 = inlined_call_operand.vmem [shape: bf16[4,128,512], index: 0, kind: input, shape index: {}]
  %s1 = inlined_call_operand.vmem [shape: bf16[8,128], index: 1, kind: input, shape index: {}]
  %s2 = inlined_call_operand.vmem [shape: f32[8,1], index: 2, kind: input, shape index: {}]
  %s3 = inlined_call_operand.vmem [shape: f32[8,512], index: 3, kind: output, shape index: {}]
  %s4 = sld [smem:[#allocation0]]
  $region83: #{cnn_forward.3} parent=0
    _
  %s6 = ssub.s32 1, %s4
  %s7 = scalar_select 0, %s6, %s4
  $region1: #{cnn_forward.3} parent=0
    #allocation2 [shape = 'u8[524288]{0}', space=vmem, size = 0x80000, scoped, tag = 'input window, operand 0']
    loop: start=0, step=1, limit=4
    $region2: #{cnn_forward.3} parent=1 // loop_pre_header
      _
    $region3: #{cnn_forward.3} parent=1 // loop_header
      %s9 = sphi 0, %s13
      %p10 = scmp.ge.s32.totalorder %s9, 4
      %s19 = sphi 0, %s21
      %s22 = sphi 0, %s19
      %s23 = sphi 0, %s22
      %s39 = sphi 0, %s23
      %s43 = sphi 0, %s43
      %s45 = sphi 0, %s43
      %s46 = sphi 0, %s45
      %s60 = sphi 0, %s46
      %s64 = sphi 0, %s64
      %s66 = sphi 0, %s64
      %s67 = sphi 0, %s66
      %s81 = sphi 0, %s67
      %s87 = sphi 0, %s89
      %s90 = sphi 0, %s87
      %s91 = sphi 0, %s90
      %s107 = sphi 0, %s91
    $region4: #{cnn_forward.3} parent=1 // loop_header_branch
      %12 = sbr.rel (%p10) target = $region8
    $region5: #{cnn_forward.3} parent=1 // loop_body
      %s14 = ssub.s32 %s9, 1
      %s15 = ssub.s32 %s9, 2
      %s16 = sadd.s32 %s9, 1
      %s17 = ssub.s32 %s9, %s16
      %p18 = scmp.eq.s32.totalorder %s17, 0
      %s20 = sadd.s32 %s19, 1
      %s21 = scalar_select %p18, %s19, %s20
      %p24 = pneg %p18
      %p25 = scmp.eq.s32.totalorder %s9, 1
      %p26 = por %p24, %p25
      %p27 = scmp.ne.s32.totalorder %s19, %s22
      %p28 = scmp.eq.s32.totalorder %s9, 0
      %p29 = por %p27, %p28
      %p30 = scmp.ne.s32.totalorder %s19, %s22
      %p31 = scmp.eq.s32.totalorder %s14, 1
      %p32 = por %p30, %p31
      %p33 = scmp.ne.s32.totalorder %s22, %s23
      %p34 = scmp.eq.s32.totalorder %s14, 0
      %p35 = por %p33, %p34
      %p36 = scmp.ne.s32.totalorder %s22, %s23
      %p37 = scmp.eq.s32.totalorder %s15, 1
      %p38 = por %p36, %p37
      %p40 = scmp.ne.s32.totalorder %s23, %s39
      %p41 = scmp.eq.s32.totalorder %s15, 0
      %p42 = por %p40, %p41
      %s44 = sadd.s32 %s43, 1
      %p47 = scmp.eq.s32.totalorder %s9, 1
      %p48 = scmp.ne.s32.totalorder %s43, %s45
      %p49 = scmp.eq.s32.totalorder %s9, 0
      %p50 = por %p48, %p49
      %p51 = scmp.ne.s32.totalorder %s43, %s45
      %p52 = scmp.eq.s32.totalorder %s14, 1
      %p53 = por %p51, %p52
      %p54 = scmp.ne.s32.totalorder %s45, %s46
      %p55 = scmp.eq.s32.totalorder %s14, 0
      %p56 = por %p54, %p55
      %p57 = scmp.ne.s32.totalorder %s45, %s46
      %p58 = scmp.eq.s32.totalorder %s15, 1
      %p59 = por %p57, %p58
      %p61 = scmp.ne.s32.totalorder %s46, %s60
      %p62 = scmp.eq.s32.totalorder %s15, 0
      %p63 = por %p61, %p62
      %s65 = sadd.s32 %s64, 1
      %p68 = scmp.eq.s32.totalorder %s9, 1
      %p69 = scmp.ne.s32.totalorder %s64, %s66
      %p70 = scmp.eq.s32.totalorder %s9, 0
      %p71 = por %p69, %p70
      %p72 = scmp.ne.s32.totalorder %s64, %s66
      %p73 = scmp.eq.s32.totalorder %s14, 1
      %p74 = por %p72, %p73
      %p75 = scmp.ne.s32.totalorder %s66, %s67
      %p76 = scmp.eq.s32.totalorder %s14, 0
      %p77 = por %p75, %p76
      %p78 = scmp.ne.s32.totalorder %s66, %s67
      %p79 = scmp.eq.s32.totalorder %s15, 1
      %p80 = por %p78, %p79
      %p82 = scmp.ne.s32.totalorder %s67, %s81
      %p83 = scmp.eq.s32.totalorder %s15, 0
      %p84 = por %p82, %p83
      %s85 = ssub.s32 %s9, %s16
      %p86 = scmp.eq.s32.totalorder %s85, 0
      %s88 = sadd.s32 %s87, 1
      %s89 = scalar_select %p86, %s87, %s88
      %p92 = pneg %p86
      %p93 = scmp.eq.s32.totalorder %s9, 1
      %p94 = por %p92, %p93
      %p95 = scmp.ne.s32.totalorder %s87, %s90
      %p96 = scmp.eq.s32.totalorder %s9, 0
      %p97 = por %p95, %p96
      %p98 = scmp.ne.s32.totalorder %s87, %s90
      %p99 = scmp.eq.s32.totalorder %s14, 1
      %p100 = por %p98, %p99
      %p101 = scmp.ne.s32.totalorder %s90, %s91
      %p102 = scmp.eq.s32.totalorder %s14, 0
      %p103 = por %p101, %p102
      %p104 = scmp.ne.s32.totalorder %s90, %s91
      %p105 = scmp.eq.s32.totalorder %s15, 1
      %p106 = por %p104, %p105
      %p108 = scmp.ne.s32.totalorder %s91, %s107
      %p109 = scmp.eq.s32.totalorder %s15, 0
      %p110 = por %p108, %p109
      %p111 = scmp.le.s32.totalorder 1, %s9
      %p112 = scmp.lt.s32.totalorder %s9, 3
      %p113 = pnand %p111, %p112
      %p114 = pneg %p113
      // Predicated region
      $region9: #{cnn_forward.3} parent=5 // pred_check
        _
      $region10: #{cnn_forward.3} parent=5 // pred_check_branch
        %116 = sbr.rel (%p113) target = $region12
      $region11: #{cnn_forward.3} parent=5 // pred_region
        %s117 = ssub.s32 %s9, 1
        // Predicated region
        $region13: #{cnn_forward.3} parent=11 // pred_check
          %p118 = pneg %p56
        $region14: #{cnn_forward.3} parent=11 // pred_check_branch
          %120 = sbr.rel (%p118) target = $region16
        $region15: #{cnn_forward.3} parent=11 // pred_region
          _
        $region16: #{cnn_forward.3} parent=11 // pred_fallthru
          _
        // Predicated region
        $region17: #{cnn_forward.3} parent=11 // pred_check
          %p121 = pneg %p77
        $region18: #{cnn_forward.3} parent=11 // pred_check_branch
          %123 = sbr.rel (%p121) target = $region20
        $region19: #{cnn_forward.3} parent=11 // pred_region
          _
        $region20: #{cnn_forward.3} parent=11 // pred_fallthru
          _
      $region12: #{cnn_forward.3} parent=5 // pred_fallthru
        _
      %p124 = scmp.lt.s32.totalorder %s9, 2
      // Predicated region
      $region21: #{cnn_forward.3} parent=5 // pred_check
        %p125 = pneg %p124
      $region22: #{cnn_forward.3} parent=5 // pred_check_branch
        %127 = sbr.rel (%p125) target = $region24
      $region23: #{cnn_forward.3} parent=5 // pred_region
        // Predicated region
        $region25: #{cnn_forward.3} parent=23 // pred_check
          %p128 = pneg %p29
        $region26: #{cnn_forward.3} parent=23 // pred_check_branch
          %130 = sbr.rel (%p128) target = $region28
        $region27: #{cnn_forward.3} parent=23 // pred_region
          %s131 = sand.u32 %s19, 1
          %s132 = sand.u32 %s19, 1
          %s133 = smul.addr %s132, 512
          %s134 = scalar_lea.vmem [#allocation2], %s133
          %s135 = smul.u32 2, %s9
          %s136 = smul.addr %s135, 4
          %s137 = scalar_lea.vmem %s0, %s136
          // Predicated region
          $region29: #{cnn_forward.3} parent=27 // pred_check
            _
          $region30: #{cnn_forward.3} parent=27 // pred_check_branch
            %139 = sbr.rel (0) target = $region32
          $region31: #{cnn_forward.3} parent=27 // pred_region
            // Predicated region
            $region33: #{cnn_forward.3} parent=31 // pred_check
              _
            $region34: #{cnn_forward.3} parent=31 // pred_check_branch
              %141 = sbr.rel (0) target = $region36
            $region35: #{cnn_forward.3} parent=31 // pred_region
              // Predicated region
              $region48: #{cnn_forward.3} parent=35 // pred_check
                _
              $region49: #{cnn_forward.3} parent=35 // pred_check_branch
                %283 = sbr.rel (0) target = $region51
              $region50: #{cnn_forward.3} parent=35 // pred_region
                loop: start=0, step=1, limit=1
                $region52: #{cnn_forward.3} parent=50 // loop_pre_header
                  _
                $region53: #{cnn_forward.3} parent=50 // loop_header
                  %s285 = sphi 0, %s289
                  %p286 = scmp.ge.s32.totalorder %s285, 1
                  %s290 = sphi %s137, %s137
                  %s291 = sphi %s134, %s134
                $region54: #{cnn_forward.3} parent=50 // loop_header_branch
                  %288 = sbr.rel (%p286) target = $region58
                $region55: #{cnn_forward.3} parent=50 // loop_body
                  %v292 = vld [vmem:[%s290] sm:$0xff]
                  %293 = vst [vmem:[%s291] sm:$0xff] %v292
                  %v294 = vld [vmem:[%s290 + $0x10] sm:$0xff]
                  %295 = vst [vmem:[%s291 + $0x8] sm:$0xff] %v294
                  %v296 = vld [vmem:[%s290 + $0x20] sm:$0xff]
                  %297 = vst [vmem:[%s291 + $0x10] sm:$0xff] %v296
                  %v298 = vld [vmem:[%s290 + $0x30] sm:$0xff]
                  %299 = vst [vmem:[%s291 + $0x18] sm:$0xff] %v298
                  %v300 = vld [vmem:[%s290 + $0x40] sm:$0xff]
                  %301 = vst [vmem:[%s291 + $0x20] sm:$0xff] %v300
                  %v302 = vld [vmem:[%s290 + $0x50] sm:$0xff]
                  %303 = vst [vmem:[%s291 + $0x28] sm:$0xff] %v302
                  %v304 = vld [vmem:[%s290 + $0x60] sm:$0xff]
                  %305 = vst [vmem:[%s291 + $0x30] sm:$0xff] %v304
                  %v306 = vld [vmem:[%s290 + $0x70] sm:$0xff]
                  %307 = vst [vmem:[%s291 + $0x38] sm:$0xff] %v306
                  %v308 = vld [vmem:[%s290 + $0x80] sm:$0xff]
                  %309 = vst [vmem:[%s291 + $0x40] sm:$0xff] %v308
                  %v310 = vld [vmem:[%s290 + $0x90] sm:$0xff]
                  %311 = vst [vmem:[%s291 + $0x48] sm:$0xff] %v310
                  %v312 = vld [vmem:[%s290 + $0xa0] sm:$0xff]
                  %313 = vst [vmem:[%s291 + $0x50] sm:$0xff] %v312
                  %v314 = vld [vmem:[%s290 + $0xb0] sm:$0xff]
                  %315 = vst [vmem:[%s291 + $0x58] sm:$0xff] %v314
                  %v316 = vld [vmem:[%s290 + $0xc0] sm:$0xff]
                  %317 = vst [vmem:[%s291 + $0x60] sm:$0xff] %v316
                  %v318 = vld [vmem:[%s290 + $0xd0] sm:$0xff]
                  %319 = vst [vmem:[%s291 + $0x68] sm:$0xff] %v318
                  %v320 = vld [vmem:[%s290 + $0xe0] sm:$0xff]
                  %321 = vst [vmem:[%s291 + $0x70] sm:$0xff] %v320
                  %v322 = vld [vmem:[%s290 + $0xf0] sm:$0xff]
                  %323 = vst [vmem:[%s291 + $0x78] sm:$0xff] %v322
                  %v324 = vld [vmem:[%s290 + $0x100] sm:$0xff]
                  %325 = vst [vmem:[%s291 + $0x80] sm:$0xff] %v324
                  %v326 = vld [vmem:[%s290 + $0x110] sm:$0xff]
                  %327 = vst [vmem:[%s291 + $0x88] sm:$0xff] %v326
                  %v328 = vld [vmem:[%s290 + $0x120] sm:$0xff]
                  %329 = vst [vmem:[%s291 + $0x90] sm:$0xff] %v328
                  %v330 = vld [vmem:[%s290 + $0x130] sm:$0xff]
                  %331 = vst [vmem:[%s291 + $0x98] sm:$0xff] %v330
                  %v332 = vld [vmem:[%s290 + $0x140] sm:$0xff]
                  %333 = vst [vmem:[%s291 + $0xa0] sm:$0xff] %v332
                  %v334 = vld [vmem:[%s290 + $0x150] sm:$0xff]
                  %335 = vst [vmem:[%s291 + $0xa8] sm:$0xff] %v334
                  %v336 = vld [vmem:[%s290 + $0x160] sm:$0xff]
                  %337 = vst [vmem:[%s291 + $0xb0] sm:$0xff] %v336
                  %v338 = vld [vmem:[%s290 + $0x170] sm:$0xff]
                  %339 = vst [vmem:[%s291 + $0xb8] sm:$0xff] %v338
                  %v340 = vld [vmem:[%s290 + $0x180] sm:$0xff]
                  %341 = vst [vmem:[%s291 + $0xc0] sm:$0xff] %v340
                  %v342 = vld [vmem:[%s290 + $0x190] sm:$0xff]
                  %343 = vst [vmem:[%s291 + $0xc8] sm:$0xff] %v342
                  %v344 = vld [vmem:[%s290 + $0x1a0] sm:$0xff]
                  %345 = vst [vmem:[%s291 + $0xd0] sm:$0xff] %v344
                  %v346 = vld [vmem:[%s290 + $0x1b0] sm:$0xff]
                  %347 = vst [vmem:[%s291 + $0xd8] sm:$0xff] %v346
                  %v348 = vld [vmem:[%s290 + $0x1c0] sm:$0xff]
                  %349 = vst [vmem:[%s291 + $0xe0] sm:$0xff] %v348
                  %v350 = vld [vmem:[%s290 + $0x1d0] sm:$0xff]
                  %351 = vst [vmem:[%s291 + $0xe8] sm:$0xff] %v350
                  %v352 = vld [vmem:[%s290 + $0x1e0] sm:$0xff]
                  %353 = vst [vmem:[%s291 + $0xf0] sm:$0xff] %v352
                  %v354 = vld [vmem:[%s290 + $0x1f0] sm:$0xff]
                  %355 = vst [vmem:[%s291 + $0xf8] sm:$0xff] %v354
                  %v356 = vld [vmem:[%s290 + $0x200] sm:$0xff]
                  %357 = vst [vmem:[%s291 + $0x100] sm:$0xff] %v356
                  %v358 = vld [vmem:[%s290 + $0x210] sm:$0xff]
                  %359 = vst [vmem:[%s291 + $0x108] sm:$0xff] %v358
                  %v360 = vld [vmem:[%s290 + $0x220] sm:$0xff]
                  %361 = vst [vmem:[%s291 + $0x110] sm:$0xff] %v360
                  %v362 = vld [vmem:[%s290 + $0x230] sm:$0xff]
                  %363 = vst [vmem:[%s291 + $0x118] sm:$0xff] %v362
                  %v364 = vld [vmem:[%s290 + $0x240] sm:$0xff]
                  %365 = vst [vmem:[%s291 + $0x120] sm:$0xff] %v364
                  %v366 = vld [vmem:[%s290 + $0x250] sm:$0xff]
                  %367 = vst [vmem:[%s291 + $0x128] sm:$0xff] %v366
                  %v368 = vld [vmem:[%s290 + $0x260] sm:$0xff]
                  %369 = vst [vmem:[%s291 + $0x130] sm:$0xff] %v368
                  %v370 = vld [vmem:[%s290 + $0x270] sm:$0xff]
                  %371 = vst [vmem:[%s291 + $0x138] sm:$0xff] %v370
                  %v372 = vld [vmem:[%s290 + $0x280] sm:$0xff]
                  %373 = vst [vmem:[%s291 + $0x140] sm:$0xff] %v372
                  %v374 = vld [vmem:[%s290 + $0x290] sm:$0xff]
                  %375 = vst [vmem:[%s291 + $0x148] sm:$0xff] %v374
                  %v376 = vld [vmem:[%s290 + $0x2a0] sm:$0xff]
                  %377 = vst [vmem:[%s291 + $0x150] sm:$0xff] %v376
                  %v378 = vld [vmem:[%s290 + $0x2b0] sm:$0xff]
                  %379 = vst [vmem:[%s291 + $0x158] sm:$0xff] %v378
                  %v380 = vld [vmem:[%s290 + $0x2c0] sm:$0xff]
                  %381 = vst [vmem:[%s291 + $0x160] sm:$0xff] %v380
                  %v382 = vld [vmem:[%s290 + $0x2d0] sm:$0xff]
                  %383 = vst [vmem:[%s291 + $0x168] sm:$0xff] %v382
                  %v384 = vld [vmem:[%s290 + $0x2e0] sm:$0xff]
                  %385 = vst [vmem:[%s291 + $0x170] sm:$0xff] %v384
                  %v386 = vld [vmem:[%s290 + $0x2f0] sm:$0xff]
                  %387 = vst [vmem:[%s291 + $0x178] sm:$0xff] %v386
                  %v388 = vld [vmem:[%s290 + $0x300] sm:$0xff]
                  %389 = vst [vmem:[%s291 + $0x180] sm:$0xff] %v388
                  %v390 = vld [vmem:[%s290 + $0x310] sm:$0xff]
                  %391 = vst [vmem:[%s291 + $0x188] sm:$0xff] %v390
                  %v392 = vld [vmem:[%s290 + $0x320] sm:$0xff]
                  %393 = vst [vmem:[%s291 + $0x190] sm:$0xff] %v392
                  %v394 = vld [vmem:[%s290 + $0x330] sm:$0xff]
                  %395 = vst [vmem:[%s291 + $0x198] sm:$0xff] %v394
                  %v396 = vld [vmem:[%s290 + $0x340] sm:$0xff]
                  %397 = vst [vmem:[%s291 + $0x1a0] sm:$0xff] %v396
                  %v398 = vld [vmem:[%s290 + $0x350] sm:$0xff]
                  %399 = vst [vmem:[%s291 + $0x1a8] sm:$0xff] %v398
                  %v400 = vld [vmem:[%s290 + $0x360] sm:$0xff]
                  %401 = vst [vmem:[%s291 + $0x1b0] sm:$0xff] %v400
                  %v402 = vld [vmem:[%s290 + $0x370] sm:$0xff]
                  %403 = vst [vmem:[%s291 + $0x1b8] sm:$0xff] %v402
                  %v404 = vld [vmem:[%s290 + $0x380] sm:$0xff]
                  %405 = vst [vmem:[%s291 + $0x1c0] sm:$0xff] %v404
                  %v406 = vld [vmem:[%s290 + $0x390] sm:$0xff]
                  %407 = vst [vmem:[%s291 + $0x1c8] sm:$0xff] %v406
                  %v408 = vld [vmem:[%s290 + $0x3a0] sm:$0xff]
                  %409 = vst [vmem:[%s291 + $0x1d0] sm:$0xff] %v408
                  %v410 = vld [vmem:[%s290 + $0x3b0] sm:$0xff]
                  %411 = vst [vmem:[%s291 + $0x1d8] sm:$0xff] %v410
                  %v412 = vld [vmem:[%s290 + $0x3c0] sm:$0xff]
                  %413 = vst [vmem:[%s291 + $0x1e0] sm:$0xff] %v412
                  %v414 = vld [vmem:[%s290 + $0x3d0] sm:$0xff]
                  %415 = vst [vmem:[%s291 + $0x1e8] sm:$0xff] %v414
                  %v416 = vld [vmem:[%s290 + $0x3e0] sm:$0xff]
                  %417 = vst [vmem:[%s291 + $0x1f0] sm:$0xff] %v416
                  %v418 = vld [vmem:[%s290 + $0x3f0] sm:$0xff]
                  %419 = vst [vmem:[%s291 + $0x1f8] sm:$0xff] %v418
                $region56: #{cnn_forward.3} parent=50 // loop_footer
                  %s289 = sadd.s32 1, %s285
                $region57: #{cnn_forward.3} parent=50 // loop_footer_branch
                  %284 = sbr.rel target = $region53
                $region58: #{cnn_forward.3} parent=50 // loop_exit
                  _
              $region51: #{cnn_forward.3} parent=35 // pred_fallthru
                _
              // Predicated region
              $region59: #{cnn_forward.3} parent=35 // pred_check
                _
              $region60: #{cnn_forward.3} parent=35 // pred_check_branch
                %421 = sbr.rel target = $region62
              $region61: #{cnn_forward.3} parent=35 // pred_region
                _
              $region62: #{cnn_forward.3} parent=35 // pred_fallthru
                _
            $region36: #{cnn_forward.3} parent=31 // pred_fallthru
              _
            // Predicated region
            $region37: #{cnn_forward.3} parent=31 // pred_check
              _
            $region38: #{cnn_forward.3} parent=31 // pred_check_branch
              %143 = sbr.rel target = $region40
            $region39: #{cnn_forward.3} parent=31 // pred_region
              %s145 = ssub.s32 256, 1
              loop: start=0, step=1, limit=1
              $region41: #{cnn_forward.3} parent=39 // loop_pre_header
                _
              $region42: #{cnn_forward.3} parent=39 // loop_header
                %s147 = sphi 0, %s151
                %p148 = scmp.ge.s32.totalorder %s147, 1
                %s152 = sphi %s137, %s137
                %s153 = sphi %s134, %s134
              $region43: #{cnn_forward.3} parent=39 // loop_header_branch
                %150 = sbr.rel (%p148) target = $region47
              $region44: #{cnn_forward.3} parent=39 // loop_body
                %v154 = vld [vmem:[%s152] sm:%s145]
                %155 = vst [vmem:[%s153] sm:%s145] %v154
                %v156 = vld [vmem:[%s152 + $0x10] sm:%s145]
                %157 = vst [vmem:[%s153 + $0x8] sm:%s145] %v156
                %v158 = vld [vmem:[%s152 + $0x20] sm:%s145]
                %159 = vst [vmem:[%s153 + $0x10] sm:%s145] %v158
                %v160 = vld [vmem:[%s152 + $0x30] sm:%s145]
                %161 = vst [vmem:[%s153 + $0x18] sm:%s145] %v160
                %v162 = vld [vmem:[%s152 + $0x40] sm:%s145]
                %163 = vst [vmem:[%s153 + $0x20] sm:%s145] %v162
                %v164 = vld [vmem:[%s152 + $0x50] sm:%s145]
                %165 = vst [vmem:[%s153 + $0x28] sm:%s145] %v164
                %v166 = vld [vmem:[%s152 + $0x60] sm:%s145]
                %167 = vst [vmem:[%s153 + $0x30] sm:%s145] %v166
                %v168 = vld [vmem:[%s152 + $0x70] sm:%s145]
                %169 = vst [vmem:[%s153 + $0x38] sm:%s145] %v168
                %v170 = vld [vmem:[%s152 + $0x80] sm:%s145]
                %171 = vst [vmem:[%s153 + $0x40] sm:%s145] %v170
                %v172 = vld [vmem:[%s152 + $0x90] sm:%s145]
                %173 = vst [vmem:[%s153 + $0x48] sm:%s145] %v172
                %v174 = vld [vmem:[%s152 + $0xa0] sm:%s145]
                %175 = vst [vmem:[%s153 + $0x50] sm:%s145] %v174
                %v176 = vld [vmem:[%s152 + $0xb0] sm:%s145]
                %177 = vst [vmem:[%s153 + $0x58] sm:%s145] %v176
                %v178 = vld [vmem:[%s152 + $0xc0] sm:%s145]
                %179 = vst [vmem:[%s153 + $0x60] sm:%s145] %v178
                %v180 = vld [vmem:[%s152 + $0xd0] sm:%s145]
                %181 = vst [vmem:[%s153 + $0x68] sm:%s145] %v180
                %v182 = vld [vmem:[%s152 + $0xe0] sm:%s145]
                %183 = vst [vmem:[%s153 + $0x70] sm:%s145] %v182
                %v184 = vld [vmem:[%s152 + $0xf0] sm:%s145]
                %185 = vst [vmem:[%s153 + $0x78] sm:%s145] %v184
                %v186 = vld [vmem:[%s152 + $0x100] sm:%s145]
                %187 = vst [vmem:[%s153 + $0x80] sm:%s145] %v186
                %v188 = vld [vmem:[%s152 + $0x110] sm:%s145]
                %189 = vst [vmem:[%s153 + $0x88] sm:%s145] %v188
                %v190 = vld [vmem:[%s152 + $0x120] sm:%s145]
                %191 = vst [vmem:[%s153 + $0x90] sm:%s145] %v190
                %v192 = vld [vmem:[%s152 + $0x130] sm:%s145]
                %193 = vst [vmem:[%s153 + $0x98] sm:%s145] %v192
                %v194 = vld [vmem:[%s152 + $0x140] sm:%s145]
                %195 = vst [vmem:[%s153 + $0xa0] sm:%s145] %v194
                %v196 = vld [vmem:[%s152 + $0x150] sm:%s145]
                %197 = vst [vmem:[%s153 + $0xa8] sm:%s145] %v196
                %v198 = vld [vmem:[%s152 + $0x160] sm:%s145]
                %199 = vst [vmem:[%s153 + $0xb0] sm:%s145] %v198
                %v200 = vld [vmem:[%s152 + $0x170] sm:%s145]
                %201 = vst [vmem:[%s153 + $0xb8] sm:%s145] %v200
                %v202 = vld [vmem:[%s152 + $0x180] sm:%s145]
                %203 = vst [vmem:[%s153 + $0xc0] sm:%s145] %v202
                %v204 = vld [vmem:[%s152 + $0x190] sm:%s145]
                %205 = vst [vmem:[%s153 + $0xc8] sm:%s145] %v204
                %v206 = vld [vmem:[%s152 + $0x1a0] sm:%s145]
                %207 = vst [vmem:[%s153 + $0xd0] sm:%s145] %v206
                %v208 = vld [vmem:[%s152 + $0x1b0] sm:%s145]
                %209 = vst [vmem:[%s153 + $0xd8] sm:%s145] %v208
                %v210 = vld [vmem:[%s152 + $0x1c0] sm:%s145]
                %211 = vst [vmem:[%s153 + $0xe0] sm:%s145] %v210
                %v212 = vld [vmem:[%s152 + $0x1d0] sm:%s145]
                %213 = vst [vmem:[%s153 + $0xe8] sm:%s145] %v212
                %v214 = vld [vmem:[%s152 + $0x1e0] sm:%s145]
                %215 = vst [vmem:[%s153 + $0xf0] sm:%s145] %v214
                %v216 = vld [vmem:[%s152 + $0x1f0] sm:%s145]
                %217 = vst [vmem:[%s153 + $0xf8] sm:%s145] %v216
                %v218 = vld [vmem:[%s152 + $0x200] sm:%s145]
                %219 = vst [vmem:[%s153 + $0x100] sm:%s145] %v218
                %v220 = vld [vmem:[%s152 + $0x210] sm:%s145]
                %221 = vst [vmem:[%s153 + $0x108] sm:%s145] %v220
                %v222 = vld [vmem:[%s152 + $0x220] sm:%s145]
                %223 = vst [vmem:[%s153 + $0x110] sm:%s145] %v222
                %v224 = vld [vmem:[%s152 + $0x230] sm:%s145]
                %225 = vst [vmem:[%s153 + $0x118] sm:%s145] %v224
                %v226 = vld [vmem:[%s152 + $0x240] sm:%s145]
                %227 = vst [vmem:[%s153 + $0x120] sm:%s145] %v226
                %v228 = vld [vmem:[%s152 + $0x250] sm:%s145]
                %229 = vst [vmem:[%s153 + $0x128] sm:%s145] %v228
                %v230 = vld [vmem:[%s152 + $0x260] sm:%s145]
                %231 = vst [vmem:[%s153 + $0x130] sm:%s145] %v230
                %v232 = vld [vmem:[%s152 + $0x270] sm:%s145]
                %233 = vst [vmem:[%s153 + $0x138] sm:%s145] %v232
                %v234 = vld [vmem:[%s152 + $0x280] sm:%s145]
                %235 = vst [vmem:[%s153 + $0x140] sm:%s145] %v234
                %v236 = vld [vmem:[%s152 + $0x290] sm:%s145]
                %237 = vst [vmem:[%s153 + $0x148] sm:%s145] %v236
                %v238 = vld [vmem:[%s152 + $0x2a0] sm:%s145]
                %239 = vst [vmem:[%s153 + $0x150] sm:%s145] %v238
                %v240 = vld [vmem:[%s152 + $0x2b0] sm:%s145]
                %241 = vst [vmem:[%s153 + $0x158] sm:%s145] %v240
                %v242 = vld [vmem:[%s152 + $0x2c0] sm:%s145]
                %243 = vst [vmem:[%s153 + $0x160] sm:%s145] %v242
                %v244 = vld [vmem:[%s152 + $0x2d0] sm:%s145]
                %245 = vst [vmem:[%s153 + $0x168] sm:%s145] %v244
                %v246 = vld [vmem:[%s152 + $0x2e0] sm:%s145]
                %247 = vst [vmem:[%s153 + $0x170] sm:%s145] %v246
                %v248 = vld [vmem:[%s152 + $0x2f0] sm:%s145]
                %249 = vst [vmem:[%s153 + $0x178] sm:%s145] %v248
                %v250 = vld [vmem:[%s152 + $0x300] sm:%s145]
                %251 = vst [vmem:[%s153 + $0x180] sm:%s145] %v250
                %v252 = vld [vmem:[%s152 + $0x310] sm:%s145]
                %253 = vst [vmem:[%s153 + $0x188] sm:%s145] %v252
                %v254 = vld [vmem:[%s152 + $0x320] sm:%s145]
                %255 = vst [vmem:[%s153 + $0x190] sm:%s145] %v254
                %v256 = vld [vmem:[%s152 + $0x330] sm:%s145]
                %257 = vst [vmem:[%s153 + $0x198] sm:%s145] %v256
                %v258 = vld [vmem:[%s152 + $0x340] sm:%s145]
                %259 = vst [vmem:[%s153 + $0x1a0] sm:%s145] %v258
                %v260 = vld [vmem:[%s152 + $0x350] sm:%s145]
                %261 = vst [vmem:[%s153 + $0x1a8] sm:%s145] %v260
                %v262 = vld [vmem:[%s152 + $0x360] sm:%s145]
                %263 = vst [vmem:[%s153 + $0x1b0] sm:%s145] %v262
                %v264 = vld [vmem:[%s152 + $0x370] sm:%s145]
                %265 = vst [vmem:[%s153 + $0x1b8] sm:%s145] %v264
                %v266 = vld [vmem:[%s152 + $0x380] sm:%s145]
                %267 = vst [vmem:[%s153 + $0x1c0] sm:%s145] %v266
                %v268 = vld [vmem:[%s152 + $0x390] sm:%s145]
                %269 = vst [vmem:[%s153 + $0x1c8] sm:%s145] %v268
                %v270 = vld [vmem:[%s152 + $0x3a0] sm:%s145]
                %271 = vst [vmem:[%s153 + $0x1d0] sm:%s145] %v270
                %v272 = vld [vmem:[%s152 + $0x3b0] sm:%s145]
                %273 = vst [vmem:[%s153 + $0x1d8] sm:%s145] %v272
                %v274 = vld [vmem:[%s152 + $0x3c0] sm:%s145]
                %275 = vst [vmem:[%s153 + $0x1e0] sm:%s145] %v274
                %v276 = vld [vmem:[%s152 + $0x3d0] sm:%s145]
                %277 = vst [vmem:[%s153 + $0x1e8] sm:%s145] %v276
                %v278 = vld [vmem:[%s152 + $0x3e0] sm:%s145]
                %279 = vst [vmem:[%s153 + $0x1f0] sm:%s145] %v278
                %v280 = vld [vmem:[%s152 + $0x3f0] sm:%s145]
                %281 = vst [vmem:[%s153 + $0x1f8] sm:%s145] %v280
              $region45: #{cnn_forward.3} parent=39 // loop_footer
                %s151 = sadd.s32 1, %s147
              $region46: #{cnn_forward.3} parent=39 // loop_footer_branch
                %146 = sbr.rel target = $region42
              $region47: #{cnn_forward.3} parent=39 // loop_exit
                _
            $region40: #{cnn_forward.3} parent=31 // pred_fallthru
              _
          $region32: #{cnn_forward.3} parent=27 // pred_fallthru
            _
          %422 = vnop
        $region28: #{cnn_forward.3} parent=23 // pred_fallthru
          _
      $region24: #{cnn_forward.3} parent=5 // pred_fallthru
        _
      %p423 = scmp.le.s32.totalorder 1, %s9
      %p424 = scmp.lt.s32.totalorder %s9, 3
      %p425 = pnand %p423, %p424
      %p426 = pneg %p425
      // Predicated region
      $region63: #{cnn_forward.3} parent=5 // pred_check
        _
      $region64: #{cnn_forward.3} parent=5 // pred_check_branch
        %428 = sbr.rel (%p425) target = $region66
      $region65: #{cnn_forward.3} parent=5 // pred_region
        %s429 = ssub.s32 %s9, 1
        %s430 = sand.u32 %s22, 1
        %s431 = sand.u32 %s22, 1
        %s432 = smul.addr %s431, 512
        %s433 = scalar_lea.vmem [#allocation2], %s432
        // Predicated region
        $region67: #{cnn_forward.3} parent=65 // pred_check
          %p434 = pneg %p35
        $region68: #{cnn_forward.3} parent=65 // pred_check_branch
          %436 = sbr.rel (%p434) target = $region70
        $region69: #{cnn_forward.3} parent=65 // pred_region
          _
        $region70: #{cnn_forward.3} parent=65 // pred_fallthru
          _
        %s437 = sand.u32 %s22, 1
        %s438 = sand.u32 %s22, 1
        %s439 = smul.addr %s438, 512
        %s440 = scalar_lea.vmem [#allocation2], %s439
        %p441 = pneg %p35
        %p442 = pneg %p32
        %p443 = pneg %p56
        %p444 = pneg %p53
        %p445 = pneg %p77
        %p446 = pneg %p74
        %p447 = pneg %p103
        %p448 = pneg %p100
        %s449 = smul.u32 2, %s14
        %p450 = scmp.lt.s32.totalorder %s449, 3
        %s451 = scalar_select %p450, %s449, 3
        %s452 = smul.addr %s451, 8
        %s453 = scalar_lea.vmem %s3, %s452
        %s454 = smul.u32 2, %s14
        %s455 = smul.u32 2, %s14
        %p456 = scmp.lt.s32.totalorder %s455, 3
        %s457 = scalar_select %p456, %s455, 3
        %s458 = smul.addr %s457, 8
        %s459 = scalar_lea.vmem %s3, %s458
        %s460 = smul.u32 2, %s14
        %v461 = vld [vmem:[%s1] sm:$0xf]
        %v462 = vld [vmem:[%s433] sm:$0xff]
        %v463 = vld [vmem:[%s433 + $0x8] sm:$0xff]
        %v464 = vld [vmem:[%s433 + $0x10] sm:$0xff]
        %v465 = vld [vmem:[%s433 + $0x18] sm:$0xff]
        %v466 = vld [vmem:[%s433 + $0x20] sm:$0xff]
        %v467 = vld [vmem:[%s433 + $0x28] sm:$0xff]
        %v468 = vld [vmem:[%s433 + $0x30] sm:$0xff]
        %v469 = vld [vmem:[%s433 + $0x38] sm:$0xff]
        %v470 = vld [vmem:[%s433 + $0x40] sm:$0xff]
        %v471 = vld [vmem:[%s433 + $0x48] sm:$0xff]
        %v472 = vld [vmem:[%s433 + $0x50] sm:$0xff]
        %v473 = vld [vmem:[%s433 + $0x58] sm:$0xff]
        %v474 = vld [vmem:[%s433 + $0x60] sm:$0xff]
        %v475 = vld [vmem:[%s433 + $0x68] sm:$0xff]
        %v476 = vld [vmem:[%s433 + $0x70] sm:$0xff]
        %v477 = vld [vmem:[%s433 + $0x78] sm:$0xff]
        %v494 = vunpack.c.l.b16 %v462
        %v495 = vunpack.c.h.b16 %v462
        %v496 = vunpack.c.l.b16 %v463
        %v497 = vunpack.c.h.b16 %v463
        %v498 = vunpack.c.l.b16 %v464
        %v499 = vunpack.c.h.b16 %v464
        %v500 = vunpack.c.l.b16 %v465
        %v501 = vunpack.c.h.b16 %v465
        %v502 = vunpack.c.l.b16 %v466
        %v503 = vunpack.c.h.b16 %v466
        %v504 = vunpack.c.l.b16 %v467
        %v505 = vunpack.c.h.b16 %v467
        %v506 = vunpack.c.l.b16 %v468
        %v507 = vunpack.c.h.b16 %v468
        %v508 = vunpack.c.l.b16 %v469
        %v509 = vunpack.c.h.b16 %v469
        %v510 = vunpack.c.l.b16 %v470
        %v511 = vunpack.c.h.b16 %v470
        %v512 = vunpack.c.l.b16 %v471
        %v513 = vunpack.c.h.b16 %v471
        %v514 = vunpack.c.l.b16 %v472
        %v515 = vunpack.c.h.b16 %v472
        %v516 = vunpack.c.l.b16 %v473
        %v517 = vunpack.c.h.b16 %v473
        %v518 = vunpack.c.l.b16 %v474
        %v519 = vunpack.c.h.b16 %v474
        %v520 = vunpack.c.l.b16 %v475
        %v521 = vunpack.c.h.b16 %v475
        %v522 = vunpack.c.l.b16 %v476
        %v523 = vunpack.c.h.b16 %v476
        %v524 = vunpack.c.l.b16 %v477
        %v525 = vunpack.c.h.b16 %v477
        %v526 = vpack.c.b16 %v496, %v494
        %v527 = vpack.c.b16 %v497, %v495
        %v528 = vpack.c.b16 %v500, %v498
        %v529 = vpack.c.b16 %v501, %v499
        %v530 = vpack.c.b16 %v504, %v502
        %v531 = vpack.c.b16 %v505, %v503
        %v532 = vpack.c.b16 %v508, %v506
        %v533 = vpack.c.b16 %v509, %v507
        %v534 = vpack.c.b16 %v512, %v510
        %v535 = vpack.c.b16 %v513, %v511
        %v536 = vpack.c.b16 %v516, %v514
        %v537 = vpack.c.b16 %v517, %v515
        %v538 = vpack.c.b16 %v520, %v518
        %v539 = vpack.c.b16 %v521, %v519
        %v540 = vpack.c.b16 %v524, %v522
        %v541 = vpack.c.b16 %v525, %v523
        %558 = vmatpush.bf16.msra.mxu0 %v540
        %559 = vmatpush.bf16.msra.mxu0 %v538
        %560 = vmatpush.bf16.msra.mxu0 %v536
        %561 = vmatpush.bf16.msra.mxu0 %v534
        %562 = vmatpush.bf16.msra.mxu0 %v532
        %563 = vmatpush.bf16.msra.mxu0 %v530
        %564 = vmatpush.bf16.msra.mxu0 %v528
        %565 = vmatpush.bf16.msra.mxu0 %v526
        %566 = vmatmul.bf16.gmra.mxu0 %v461
        %v567 = vpop.f32.mrf.mxu0
        %v568 = vadd.f32 0.0, %v567
        %v569 = vpop.f32.mrf.mxu0
        %570 = vdwg.mxu0
        %571 = vmatpush.bf16.msra.mxu0 %v541
        %572 = vmatpush.bf16.msra.mxu0 %v539
        %573 = vmatpush.bf16.msra.mxu0 %v537
        %574 = vmatpush.bf16.msra.mxu0 %v535
        %575 = vmatpush.bf16.msra.mxu0 %v533
        %576 = vmatpush.bf16.msra.mxu0 %v531
        %577 = vmatpush.bf16.msra.mxu0 %v529
        %578 = vmatpush.bf16.msra.mxu0 %v527
        %579 = vmatmul.bf16.gmra.mxu0 %v461
        %v580 = vpop.f32.mrf.mxu0
        %v581 = vadd.f32 0.0, %v580
        %v582 = vpop.f32.mrf.mxu0
        %583 = vdwg.mxu0
        %s584 = scalar_lea.vmem %s433, 128 [#allocation2]
        %v585 = vld [vmem:[%s584] sm:$0xff]
        %v586 = vld [vmem:[%s584 + $0x8] sm:$0xff]
        %v587 = vld [vmem:[%s584 + $0x10] sm:$0xff]
        %v588 = vld [vmem:[%s584 + $0x18] sm:$0xff]
        %v589 = vld [vmem:[%s584 + $0x20] sm:$0xff]
        %v590 = vld [vmem:[%s584 + $0x28] sm:$0xff]
        %v591 = vld [vmem:[%s584 + $0x30] sm:$0xff]
        %v592 = vld [vmem:[%s584 + $0x38] sm:$0xff]
        %v593 = vld [vmem:[%s584 + $0x40] sm:$0xff]
        %v594 = vld [vmem:[%s584 + $0x48] sm:$0xff]
        %v595 = vld [vmem:[%s584 + $0x50] sm:$0xff]
        %v596 = vld [vmem:[%s584 + $0x58] sm:$0xff]
        %v597 = vld [vmem:[%s584 + $0x60] sm:$0xff]
        %v598 = vld [vmem:[%s584 + $0x68] sm:$0xff]
        %v599 = vld [vmem:[%s584 + $0x70] sm:$0xff]
        %v600 = vld [vmem:[%s584 + $0x78] sm:$0xff]
        %v617 = vunpack.c.l.b16 %v585
        %v618 = vunpack.c.h.b16 %v585
        %v619 = vunpack.c.l.b16 %v586
        %v620 = vunpack.c.h.b16 %v586
        %v621 = vunpack.c.l.b16 %v587
        %v622 = vunpack.c.h.b16 %v587
        %v623 = vunpack.c.l.b16 %v588
        %v624 = vunpack.c.h.b16 %v588
        %v625 = vunpack.c.l.b16 %v589
        %v626 = vunpack.c.h.b16 %v589
        %v627 = vunpack.c.l.b16 %v590
        %v628 = vunpack.c.h.b16 %v590
        %v629 = vunpack.c.l.b16 %v591
        %v630 = vunpack.c.h.b16 %v591
        %v631 = vunpack.c.l.b16 %v592
        %v632 = vunpack.c.h.b16 %v592
        %v633 = vunpack.c.l.b16 %v593
        %v634 = vunpack.c.h.b16 %v593
        %v635 = vunpack.c.l.b16 %v594
        %v636 = vunpack.c.h.b16 %v594
        %v637 = vunpack.c.l.b16 %v595
        %v638 = vunpack.c.h.b16 %v595
        %v639 = vunpack.c.l.b16 %v596
        %v640 = vunpack.c.h.b16 %v596
        %v641 = vunpack.c.l.b16 %v597
        %v642 = vunpack.c.h.b16 %v597
        %v643 = vunpack.c.l.b16 %v598
        %v644 = vunpack.c.h.b16 %v598
        %v645 = vunpack.c.l.b16 %v599
        %v646 = vunpack.c.h.b16 %v599
        %v647 = vunpack.c.l.b16 %v600
        %v648 = vunpack.c.h.b16 %v600
        %v649 = vpack.c.b16 %v619, %v617
        %v650 = vpack.c.b16 %v620, %v618
        %v651 = vpack.c.b16 %v623, %v621
        %v652 = vpack.c.b16 %v624, %v622
        %v653 = vpack.c.b16 %v627, %v625
        %v654 = vpack.c.b16 %v628, %v626
        %v655 = vpack.c.b16 %v631, %v629
        %v656 = vpack.c.b16 %v632, %v630
        %v657 = vpack.c.b16 %v635, %v633
        %v658 = vpack.c.b16 %v636, %v634
        %v659 = vpack.c.b16 %v639, %v637
        %v660 = vpack.c.b16 %v640, %v638
        %v661 = vpack.c.b16 %v643, %v641
        %v662 = vpack.c.b16 %v644, %v642
        %v663 = vpack.c.b16 %v647, %v645
        %v664 = vpack.c.b16 %v648, %v646
        %681 = vmatpush.bf16.msra.mxu0 %v663
        %682 = vmatpush.bf16.msra.mxu0 %v661
        %683 = vmatpush.bf16.msra.mxu0 %v659
        %684 = vmatpush.bf16.msra.mxu0 %v657
        %685 = vmatpush.bf16.msra.mxu0 %v655
        %686 = vmatpush.bf16.msra.mxu0 %v653
        %687 = vmatpush.bf16.msra.mxu0 %v651
        %688 = vmatpush.bf16.msra.mxu0 %v649
        %689 = vmatmul.bf16.gmra.mxu0 %v461
        %v690 = vpop.f32.mrf.mxu0
        %v691 = vadd.f32 0.0, %v690
        %v692 = vpop.f32.mrf.mxu0
        %693 = vdwg.mxu0
        %694 = vmatpush.bf16.msra.mxu0 %v664
        %695 = vmatpush.bf16.msra.mxu0 %v662
        %696 = vmatpush.bf16.msra.mxu0 %v660
        %697 = vmatpush.bf16.msra.mxu0 %v658
        %698 = vmatpush.bf16.msra.mxu0 %v656
        %699 = vmatpush.bf16.msra.mxu0 %v654
        %700 = vmatpush.bf16.msra.mxu0 %v652
        %701 = vmatpush.bf16.msra.mxu0 %v650
        %702 = vmatmul.bf16.gmra.mxu0 %v461
        %v703 = vpop.f32.mrf.mxu0
        %v704 = vadd.f32 0.0, %v703
        %v705 = vpop.f32.mrf.mxu0
        %706 = vdwg.mxu0
        %v707 = vmax.f32 %v568, %v691
        %v708 = vmax.f32 %v581, %v704
        %s709 = scalar_lea.vmem %s433, 256 [#allocation2]
        %v710 = vld [vmem:[%s709] sm:$0xff]
        %v711 = vld [vmem:[%s709 + $0x8] sm:$0xff]
        %v712 = vld [vmem:[%s709 + $0x10] sm:$0xff]
        %v713 = vld [vmem:[%s709 + $0x18] sm:$0xff]
        %v714 = vld [vmem:[%s709 + $0x20] sm:$0xff]
        %v715 = vld [vmem:[%s709 + $0x28] sm:$0xff]
        %v716 = vld [vmem:[%s709 + $0x30] sm:$0xff]
        %v717 = vld [vmem:[%s709 + $0x38] sm:$0xff]
        %v718 = vld [vmem:[%s709 + $0x40] sm:$0xff]
        %v719 = vld [vmem:[%s709 + $0x48] sm:$0xff]
        %v720 = vld [vmem:[%s709 + $0x50] sm:$0xff]
        %v721 = vld [vmem:[%s709 + $0x58] sm:$0xff]
        %v722 = vld [vmem:[%s709 + $0x60] sm:$0xff]
        %v723 = vld [vmem:[%s709 + $0x68] sm:$0xff]
        %v724 = vld [vmem:[%s709 + $0x70] sm:$0xff]
        %v725 = vld [vmem:[%s709 + $0x78] sm:$0xff]
        %v742 = vunpack.c.l.b16 %v710
        %v743 = vunpack.c.h.b16 %v710
        %v744 = vunpack.c.l.b16 %v711
        %v745 = vunpack.c.h.b16 %v711
        %v746 = vunpack.c.l.b16 %v712
        %v747 = vunpack.c.h.b16 %v712
        %v748 = vunpack.c.l.b16 %v713
        %v749 = vunpack.c.h.b16 %v713
        %v750 = vunpack.c.l.b16 %v714
        %v751 = vunpack.c.h.b16 %v714
        %v752 = vunpack.c.l.b16 %v715
        %v753 = vunpack.c.h.b16 %v715
        %v754 = vunpack.c.l.b16 %v716
        %v755 = vunpack.c.h.b16 %v716
        %v756 = vunpack.c.l.b16 %v717
        %v757 = vunpack.c.h.b16 %v717
        %v758 = vunpack.c.l.b16 %v718
        %v759 = vunpack.c.h.b16 %v718
        %v760 = vunpack.c.l.b16 %v719
        %v761 = vunpack.c.h.b16 %v719
        %v762 = vunpack.c.l.b16 %v720
        %v763 = vunpack.c.h.b16 %v720
        %v764 = vunpack.c.l.b16 %v721
        %v765 = vunpack.c.h.b16 %v721
        %v766 = vunpack.c.l.b16 %v722
        %v767 = vunpack.c.h.b16 %v722
        %v768 = vunpack.c.l.b16 %v723
        %v769 = vunpack.c.h.b16 %v723
        %v770 = vunpack.c.l.b16 %v724
        %v771 = vunpack.c.h.b16 %v724
        %v772 = vunpack.c.l.b16 %v725
        %v773 = vunpack.c.h.b16 %v725
        %v774 = vpack.c.b16 %v744, %v742
        %v775 = vpack.c.b16 %v745, %v743
        %v776 = vpack.c.b16 %v748, %v746
        %v777 = vpack.c.b16 %v749, %v747
        %v778 = vpack.c.b16 %v752, %v750
        %v779 = vpack.c.b16 %v753, %v751
        %v780 = vpack.c.b16 %v756, %v754
        %v781 = vpack.c.b16 %v757, %v755
        %v782 = vpack.c.b16 %v760, %v758
        %v783 = vpack.c.b16 %v761, %v759
        %v784 = vpack.c.b16 %v764, %v762
        %v785 = vpack.c.b16 %v765, %v763
        %v786 = vpack.c.b16 %v768, %v766
        %v787 = vpack.c.b16 %v769, %v767
        %v788 = vpack.c.b16 %v772, %v770
        %v789 = vpack.c.b16 %v773, %v771
        %806 = vmatpush.bf16.msra.mxu0 %v788
        %807 = vmatpush.bf16.msra.mxu0 %v786
        %808 = vmatpush.bf16.msra.mxu0 %v784
        %809 = vmatpush.bf16.msra.mxu0 %v782
        %810 = vmatpush.bf16.msra.mxu0 %v780
        %811 = vmatpush.bf16.msra.mxu0 %v778
        %812 = vmatpush.bf16.msra.mxu0 %v776
        %813 = vmatpush.bf16.msra.mxu0 %v774
        %814 = vmatmul.bf16.gmra.mxu0 %v461
        %v815 = vpop.f32.mrf.mxu0
        %v816 = vadd.f32 0.0, %v815
        %v817 = vpop.f32.mrf.mxu0
        %818 = vdwg.mxu0
        %819 = vmatpush.bf16.msra.mxu0 %v789
        %820 = vmatpush.bf16.msra.mxu0 %v787
        %821 = vmatpush.bf16.msra.mxu0 %v785
        %822 = vmatpush.bf16.msra.mxu0 %v783
        %823 = vmatpush.bf16.msra.mxu0 %v781
        %824 = vmatpush.bf16.msra.mxu0 %v779
        %825 = vmatpush.bf16.msra.mxu0 %v777
        %826 = vmatpush.bf16.msra.mxu0 %v775
        %827 = vmatmul.bf16.gmra.mxu0 %v461
        %v828 = vpop.f32.mrf.mxu0
        %v829 = vadd.f32 0.0, %v828
        %v830 = vpop.f32.mrf.mxu0
        %831 = vdwg.mxu0
        %v832 = vmax.f32 %v707, %v816
        %v833 = vmax.f32 %v708, %v829
        %s834 = scalar_lea.vmem %s433, 384 [#allocation2]
        %v835 = vld [vmem:[%s834] sm:$0xff]
        %v836 = vld [vmem:[%s834 + $0x8] sm:$0xff]
        %v837 = vld [vmem:[%s834 + $0x10] sm:$0xff]
        %v838 = vld [vmem:[%s834 + $0x18] sm:$0xff]
        %v839 = vld [vmem:[%s834 + $0x20] sm:$0xff]
        %v840 = vld [vmem:[%s834 + $0x28] sm:$0xff]
        %v841 = vld [vmem:[%s834 + $0x30] sm:$0xff]
        %v842 = vld [vmem:[%s834 + $0x38] sm:$0xff]
        %v843 = vld [vmem:[%s834 + $0x40] sm:$0xff]
        %v844 = vld [vmem:[%s834 + $0x48] sm:$0xff]
        %v845 = vld [vmem:[%s834 + $0x50] sm:$0xff]
        %v846 = vld [vmem:[%s834 + $0x58] sm:$0xff]
        %v847 = vld [vmem:[%s834 + $0x60] sm:$0xff]
        %v848 = vld [vmem:[%s834 + $0x68] sm:$0xff]
        %v849 = vld [vmem:[%s834 + $0x70] sm:$0xff]
        %v850 = vld [vmem:[%s834 + $0x78] sm:$0xff]
        %v867 = vunpack.c.l.b16 %v835
        %v868 = vunpack.c.h.b16 %v835
        %v869 = vunpack.c.l.b16 %v836
        %v870 = vunpack.c.h.b16 %v836
        %v871 = vunpack.c.l.b16 %v837
        %v872 = vunpack.c.h.b16 %v837
        %v873 = vunpack.c.l.b16 %v838
        %v874 = vunpack.c.h.b16 %v838
        %v875 = vunpack.c.l.b16 %v839
        %v876 = vunpack.c.h.b16 %v839
        %v877 = vunpack.c.l.b16 %v840
        %v878 = vunpack.c.h.b16 %v840
        %v879 = vunpack.c.l.b16 %v841
        %v880 = vunpack.c.h.b16 %v841
        %v881 = vunpack.c.l.b16 %v842
        %v882 = vunpack.c.h.b16 %v842
        %v883 = vunpack.c.l.b16 %v843
        %v884 = vunpack.c.h.b16 %v843
        %v885 = vunpack.c.l.b16 %v844
        %v886 = vunpack.c.h.b16 %v844
        %v887 = vunpack.c.l.b16 %v845
        %v888 = vunpack.c.h.b16 %v845
        %v889 = vunpack.c.l.b16 %v846
        %v890 = vunpack.c.h.b16 %v846
        %v891 = vunpack.c.l.b16 %v847
        %v892 = vunpack.c.h.b16 %v847
        %v893 = vunpack.c.l.b16 %v848
        %v894 = vunpack.c.h.b16 %v848
        %v895 = vunpack.c.l.b16 %v849
        %v896 = vunpack.c.h.b16 %v849
        %v897 = vunpack.c.l.b16 %v850
        %v898 = vunpack.c.h.b16 %v850
        %v899 = vpack.c.b16 %v869, %v867
        %v900 = vpack.c.b16 %v870, %v868
        %v901 = vpack.c.b16 %v873, %v871
        %v902 = vpack.c.b16 %v874, %v872
        %v903 = vpack.c.b16 %v877, %v875
        %v904 = vpack.c.b16 %v878, %v876
        %v905 = vpack.c.b16 %v881, %v879
        %v906 = vpack.c.b16 %v882, %v880
        %v907 = vpack.c.b16 %v885, %v883
        %v908 = vpack.c.b16 %v886, %v884
        %v909 = vpack.c.b16 %v889, %v887
        %v910 = vpack.c.b16 %v890, %v888
        %v911 = vpack.c.b16 %v893, %v891
        %v912 = vpack.c.b16 %v894, %v892
        %v913 = vpack.c.b16 %v897, %v895
        %v914 = vpack.c.b16 %v898, %v896
        %931 = vmatpush.bf16.msra.mxu0 %v913
        %932 = vmatpush.bf16.msra.mxu0 %v911
        %933 = vmatpush.bf16.msra.mxu0 %v909
        %934 = vmatpush.bf16.msra.mxu0 %v907
        %935 = vmatpush.bf16.msra.mxu0 %v905
        %936 = vmatpush.bf16.msra.mxu0 %v903
        %937 = vmatpush.bf16.msra.mxu0 %v901
        %938 = vmatpush.bf16.msra.mxu0 %v899
        %939 = vmatmul.bf16.gmra.mxu0 %v461
        %v940 = vpop.f32.mrf.mxu0
        %v941 = vadd.f32 0.0, %v940
        %v942 = vpop.f32.mrf.mxu0
        %943 = vdwg.mxu0
        %944 = vmatpush.bf16.msra.mxu0 %v914
        %945 = vmatpush.bf16.msra.mxu0 %v912
        %946 = vmatpush.bf16.msra.mxu0 %v910
        %947 = vmatpush.bf16.msra.mxu0 %v908
        %948 = vmatpush.bf16.msra.mxu0 %v906
        %949 = vmatpush.bf16.msra.mxu0 %v904
        %950 = vmatpush.bf16.msra.mxu0 %v902
        %951 = vmatpush.bf16.msra.mxu0 %v900
        %952 = vmatmul.bf16.gmra.mxu0 %v461
        %v953 = vpop.f32.mrf.mxu0
        %v954 = vadd.f32 0.0, %v953
        %v955 = vpop.f32.mrf.mxu0
        %956 = vdwg.mxu0
        %v957 = vmax.f32 %v832, %v941
        %v958 = vmax.f32 %v833, %v954
        %v959 = vld [vmem:[%s2] sm:$0xff]
        %961 = vset.pattern.permute.xlu0 0
        %962 = vperm.xlu0 %961, %v959
        %v963 = vpop.permute.xlu0 %962
        %v965 = vadd.f32 %v957, %v963
        %v966 = vadd.f32 %v958, %v963
        %v967 = vmax.f32 %v965, 0.0
        %v968 = vmax.f32 %v966, 0.0
        %969 = vst [vmem:[%s459] sm:$0xff] %v967
        %970 = vst [vmem:[%s459 + $0x8] sm:$0xff] %v968
        %s971 = smul.u32 2, %s14
        %p972 = scmp.lt.s32.totalorder %s971, 3
        %s973 = scalar_select %p972, %s971, 3
        %s974 = smul.addr %s973, 8
        %s975 = scalar_lea.vmem %s3, %s974
        // Predicated region
        $region71: #{cnn_forward.3} parent=65 // pred_check
          %p976 = pneg %p100
        $region72: #{cnn_forward.3} parent=65 // pred_check_branch
          %978 = sbr.rel (%p976) target = $region74
        $region73: #{cnn_forward.3} parent=65 // pred_region
          %s979 = smul.u32 2, %s14
        $region74: #{cnn_forward.3} parent=65 // pred_fallthru
          _
      $region66: #{cnn_forward.3} parent=5 // pred_fallthru
        _
      %p980 = scmp.le.s32.totalorder 2, %s9
      // Predicated region
      $region75: #{cnn_forward.3} parent=5 // pred_check
        %p981 = pneg %p980
      $region76: #{cnn_forward.3} parent=5 // pred_check_branch
        %983 = sbr.rel (%p981) target = $region78
      $region77: #{cnn_forward.3} parent=5 // pred_region
        %s984 = ssub.s32 %s9, 2
        // Predicated region
        $region79: #{cnn_forward.3} parent=77 // pred_check
          %p985 = pneg %p106
        $region80: #{cnn_forward.3} parent=77 // pred_check_branch
          %987 = sbr.rel (%p985) target = $region82
        $region81: #{cnn_forward.3} parent=77 // pred_region
          %s988 = smul.u32 2, %s15
          %p989 = scmp.lt.s32.totalorder %s988, 3
          %s990 = scalar_select %p989, %s988, 3
          %s991 = smul.addr %s990, 8
          %s992 = scalar_lea.vmem %s3, %s991
        $region82: #{cnn_forward.3} parent=77 // pred_fallthru
          _
      $region78: #{cnn_forward.3} parent=5 // pred_fallthru
        _
    $region6: #{cnn_forward.3} parent=1 // loop_footer
      %s13 = sadd.s32 1, %s9
    $region7: #{cnn_forward.3} parent=1 // loop_footer_branch
      %8 = sbr.rel target = $region3
    $region8: #{cnn_forward.3} parent=1 // loop_exit
      _

// kernel: cnn_forward.4
$region0: #{cnn_forward.4}
  #allocation0 [shape = 'u32[]', space=smem, size = 0x4, offset = 0x4, fixed_abs, tag = 'smem constant byte address 0x4 - core index']
  #allocation1 [shape = 'u32[72,128]{1,0:T(1,128)}', space=vmem, size = 0x9000, scoped, tag = 'internal scratch']
  %s0 = inlined_call_operand.vmem [shape: bf16[4,256,128], index: 0, kind: input, shape index: {}]
  %s1 = inlined_call_operand.vmem [shape: bf16[16,256], index: 1, kind: input, shape index: {}]
  %s2 = inlined_call_operand.vmem [shape: f32[16,1], index: 2, kind: input, shape index: {}]
  %s3 = inlined_call_operand.vmem [shape: f32[16,128], index: 3, kind: output, shape index: {}]
  %s4 = sld [smem:[#allocation0]]
  $region22: #{cnn_forward.4} parent=0
    _
  %s6 = ssub.s32 1, %s4
  %s7 = scalar_select 0, %s6, %s4
  // Predicated region
  $region2: #{cnn_forward.4} parent=0 // pred_check
    _
  $region3: #{cnn_forward.4} parent=0 // pred_check_branch
    %9 = sbr.rel (0) target = $region5
  $region4: #{cnn_forward.4} parent=0 // pred_region
    _
  $region5: #{cnn_forward.4} parent=0 // pred_fallthru
    _
  // Predicated region
  $region6: #{cnn_forward.4} parent=0 // pred_check
    _
  $region7: #{cnn_forward.4} parent=0 // pred_check_branch
    %11 = sbr.rel (0) target = $region9
  $region8: #{cnn_forward.4} parent=0 // pred_region
    _
  $region9: #{cnn_forward.4} parent=0 // pred_fallthru
    _
  // Predicated region
  $region10: #{cnn_forward.4} parent=0 // pred_check
    _
  $region11: #{cnn_forward.4} parent=0 // pred_check_branch
    %13 = sbr.rel (0) target = $region13
  $region12: #{cnn_forward.4} parent=0 // pred_region
    _
  $region13: #{cnn_forward.4} parent=0 // pred_fallthru
    _
  %v14 = vld [vmem:[%s1] sm:$0xff]
  %v15 = vld [vmem:[%s1 + $0x8] sm:$0xff]
  %v16 = vld [vmem:[%s0] sm:$0xf]
  %v17 = vld [vmem:[%s0 + $0x4] sm:$0xf]
  %v18 = vld [vmem:[%s0 + $0x8] sm:$0xf]
  %v19 = vld [vmem:[%s0 + $0xc] sm:$0xf]
  %v20 = vld [vmem:[%s0 + $0x10] sm:$0xf]
  %v21 = vld [vmem:[%s0 + $0x14] sm:$0xf]
  %v22 = vld [vmem:[%s0 + $0x18] sm:$0xf]
  %v23 = vld [vmem:[%s0 + $0x1c] sm:$0xf]
  %v24 = vld [vmem:[%s0 + $0x20] sm:$0xf]
  %v25 = vld [vmem:[%s0 + $0x24] sm:$0xf]
  %v26 = vld [vmem:[%s0 + $0x28] sm:$0xf]
  %v27 = vld [vmem:[%s0 + $0x2c] sm:$0xf]
  %v28 = vld [vmem:[%s0 + $0x30] sm:$0xf]
  %v29 = vld [vmem:[%s0 + $0x34] sm:$0xf]
  %v30 = vld [vmem:[%s0 + $0x38] sm:$0xf]
  %v31 = vld [vmem:[%s0 + $0x3c] sm:$0xf]
  %v32 = vld [vmem:[%s0 + $0x40] sm:$0xf]
  %v33 = vld [vmem:[%s0 + $0x44] sm:$0xf]
  %v34 = vld [vmem:[%s0 + $0x48] sm:$0xf]
  %v35 = vld [vmem:[%s0 + $0x4c] sm:$0xf]
  %v36 = vld [vmem:[%s0 + $0x50] sm:$0xf]
  %v37 = vld [vmem:[%s0 + $0x54] sm:$0xf]
  %v38 = vld [vmem:[%s0 + $0x58] sm:$0xf]
  %v39 = vld [vmem:[%s0 + $0x5c] sm:$0xf]
  %v40 = vld [vmem:[%s0 + $0x60] sm:$0xf]
  %v41 = vld [vmem:[%s0 + $0x64] sm:$0xf]
  %v42 = vld [vmem:[%s0 + $0x68] sm:$0xf]
  %v43 = vld [vmem:[%s0 + $0x6c] sm:$0xf]
  %v44 = vld [vmem:[%s0 + $0x70] sm:$0xf]
  %v45 = vld [vmem:[%s0 + $0x74] sm:$0xf]
  %v46 = vld [vmem:[%s0 + $0x78] sm:$0xf]
  %v47 = vld [vmem:[%s0 + $0x7c] sm:$0xf]
  %v50 = vunpack.c.l.b16 %v14
  %v51 = vunpack.c.h.b16 %v14
  %v52 = vunpack.c.l.b16 %v15
  %v53 = vunpack.c.h.b16 %v15
  %v54 = vpack.c.b16 %v52, %v50
  %v55 = vpack.c.b16 %v53, %v51
  %v90 = vunpack.c.l.b16 %v16
  %v91 = vunpack.c.l.b16 %v17
  %v92 = vunpack.c.l.b16 %v18
  %v93 = vunpack.c.l.b16 %v19
  %v94 = vunpack.c.l.b16 %v20
  %v95 = vunpack.c.l.b16 %v21
  %v96 = vunpack.c.l.b16 %v22
  %v97 = vunpack.c.l.b16 %v23
  %v98 = vunpack.c.l.b16 %v24
  %v99 = vunpack.c.l.b16 %v25
  %v100 = vunpack.c.l.b16 %v26
  %v101 = vunpack.c.l.b16 %v27
  %v102 = vunpack.c.l.b16 %v28
  %v103 = vunpack.c.l.b16 %v29
  %v104 = vunpack.c.l.b16 %v30
  %v105 = vunpack.c.l.b16 %v31
  %v106 = vunpack.c.l.b16 %v32
  %v107 = vunpack.c.l.b16 %v33
  %v108 = vunpack.c.l.b16 %v34
  %v109 = vunpack.c.l.b16 %v35
  %v110 = vunpack.c.l.b16 %v36
  %v111 = vunpack.c.l.b16 %v37
  %v112 = vunpack.c.l.b16 %v38
  %v113 = vunpack.c.l.b16 %v39
  %v114 = vunpack.c.l.b16 %v40
  %v115 = vunpack.c.l.b16 %v41
  %v116 = vunpack.c.l.b16 %v42
  %v117 = vunpack.c.l.b16 %v43
  %v118 = vunpack.c.l.b16 %v44
  %v119 = vunpack.c.l.b16 %v45
  %v120 = vunpack.c.l.b16 %v46
  %v121 = vunpack.c.l.b16 %v47
  %v122 = vpack.c.b16 %v91, %v90
  %v123 = vpack.c.b16 %v93, %v92
  %v124 = vpack.c.b16 %v95, %v94
  %v125 = vpack.c.b16 %v97, %v96
  %v126 = vpack.c.b16 %v99, %v98
  %v127 = vpack.c.b16 %v101, %v100
  %v128 = vpack.c.b16 %v103, %v102
  %v129 = vpack.c.b16 %v105, %v104
  %v130 = vpack.c.b16 %v107, %v106
  %v131 = vpack.c.b16 %v109, %v108
  %v132 = vpack.c.b16 %v111, %v110
  %v133 = vpack.c.b16 %v113, %v112
  %v134 = vpack.c.b16 %v115, %v114
  %v135 = vpack.c.b16 %v117, %v116
  %v136 = vpack.c.b16 %v119, %v118
  %v137 = vpack.c.b16 %v121, %v120
  %154 = vmatpush.bf16.msra.mxu0 %v129
  %155 = vmatpush.bf16.msra.mxu0 %v128
  %156 = vmatpush.bf16.msra.mxu0 %v127
  %157 = vmatpush.bf16.msra.mxu0 %v126
  %158 = vmatpush.bf16.msra.mxu0 %v125
  %159 = vmatpush.bf16.msra.mxu0 %v124
  %160 = vmatpush.bf16.msra.mxu0 %v123
  %161 = vmatpush.bf16.msra.mxu0 %v122
  %162 = vmatmul.bf16.gmra.mxu0 %v54
  %v163 = vpop.f32.mrf.mxu0
  %v164 = vadd.f32 0.0, %v163
  %v165 = vpop.f32.mrf.mxu0
  %v166 = vadd.f32 0.0, %v165
  %167 = vdwg.mxu0
  %168 = vmatpush.bf16.msra.mxu0 %v137
  %169 = vmatpush.bf16.msra.mxu0 %v136
  %170 = vmatpush.bf16.msra.mxu0 %v135
  %171 = vmatpush.bf16.msra.mxu0 %v134
  %172 = vmatpush.bf16.msra.mxu0 %v133
  %173 = vmatpush.bf16.msra.mxu0 %v132
  %174 = vmatpush.bf16.msra.mxu0 %v131
  %175 = vmatpush.bf16.msra.mxu0 %v130
  %176 = vmatmul.bf16.gmra.mxu0 %v55
  %v177 = vpop.f32.mrf.mxu0
  %v178 = vadd.f32 %v164, %v177
  %v179 = vpop.f32.mrf.mxu0
  %v180 = vadd.f32 %v166, %v179
  %181 = vdwg.mxu0
  %s182 = scalar_lea.vmem %s0, 128
  %v183 = vld [vmem:[%s182] sm:$0xf]
  %v184 = vld [vmem:[%s182 + $0x4] sm:$0xf]
  %v185 = vld [vmem:[%s182 + $0x8] sm:$0xf]
  %v186 = vld [vmem:[%s182 + $0xc] sm:$0xf]
  %v187 = vld [vmem:[%s182 + $0x10] sm:$0xf]
  %v188 = vld [vmem:[%s182 + $0x14] sm:$0xf]
  %v189 = vld [vmem:[%s182 + $0x18] sm:$0xf]
  %v190 = vld [vmem:[%s182 + $0x1c] sm:$0xf]
  %v191 = vld [vmem:[%s182 + $0x20] sm:$0xf]
  %v192 = vld [vmem:[%s182 + $0x24] sm:$0xf]
  %v193 = vld [vmem:[%s182 + $0x28] sm:$0xf]
  %v194 = vld [vmem:[%s182 + $0x2c] sm:$0xf]
  %v195 = vld [vmem:[%s182 + $0x30] sm:$0xf]
  %v196 = vld [vmem:[%s182 + $0x34] sm:$0xf]
  %v197 = vld [vmem:[%s182 + $0x38] sm:$0xf]
  %v198 = vld [vmem:[%s182 + $0x3c] sm:$0xf]
  %v199 = vld [vmem:[%s182 + $0x40] sm:$0xf]
  %v200 = vld [vmem:[%s182 + $0x44] sm:$0xf]
  %v201 = vld [vmem:[%s182 + $0x48] sm:$0xf]
  %v202 = vld [vmem:[%s182 + $0x4c] sm:$0xf]
  %v203 = vld [vmem:[%s182 + $0x50] sm:$0xf]
  %v204 = vld [vmem:[%s182 + $0x54] sm:$0xf]
  %v205 = vld [vmem:[%s182 + $0x58] sm:$0xf]
  %v206 = vld [vmem:[%s182 + $0x5c] sm:$0xf]
  %v207 = vld [vmem:[%s182 + $0x60] sm:$0xf]
  %v208 = vld [vmem:[%s182 + $0x64] sm:$0xf]
  %v209 = vld [vmem:[%s182 + $0x68] sm:$0xf]
  %v210 = vld [vmem:[%s182 + $0x6c] sm:$0xf]
  %v211 = vld [vmem:[%s182 + $0x70] sm:$0xf]
  %v212 = vld [vmem:[%s182 + $0x74] sm:$0xf]
  %v213 = vld [vmem:[%s182 + $0x78] sm:$0xf]
  %v214 = vld [vmem:[%s182 + $0x7c] sm:$0xf]
  %v247 = vunpack.c.l.b16 %v183
  %v248 = vunpack.c.l.b16 %v184
  %v249 = vunpack.c.l.b16 %v185
  %v250 = vunpack.c.l.b16 %v186
  %v251 = vunpack.c.l.b16 %v187
  %v252 = vunpack.c.l.b16 %v188
  %v253 = vunpack.c.l.b16 %v189
  %v254 = vunpack.c.l.b16 %v190
  %v255 = vunpack.c.l.b16 %v191
  %v256 = vunpack.c.l.b16 %v192
  %v257 = vunpack.c.l.b16 %v193
  %v258 = vunpack.c.l.b16 %v194
  %v259 = vunpack.c.l.b16 %v195
  %v260 = vunpack.c.l.b16 %v196
  %v261 = vunpack.c.l.b16 %v197
  %v262 = vunpack.c.l.b16 %v198
  %v263 = vunpack.c.l.b16 %v199
  %v264 = vunpack.c.l.b16 %v200
  %v265 = vunpack.c.l.b16 %v201
  %v266 = vunpack.c.l.b16 %v202
  %v267 = vunpack.c.l.b16 %v203
  %v268 = vunpack.c.l.b16 %v204
  %v269 = vunpack.c.l.b16 %v205
  %v270 = vunpack.c.l.b16 %v206
  %v271 = vunpack.c.l.b16 %v207
  %v272 = vunpack.c.l.b16 %v208
  %v273 = vunpack.c.l.b16 %v209
  %v274 = vunpack.c.l.b16 %v210
  %v275 = vunpack.c.l.b16 %v211
  %v276 = vunpack.c.l.b16 %v212
  %v277 = vunpack.c.l.b16 %v213
  %v278 = vunpack.c.l.b16 %v214
  %v279 = vpack.c.b16 %v248, %v247
  %v280 = vpack.c.b16 %v250, %v249
  %v281 = vpack.c.b16 %v252, %v251
  %v282 = vpack.c.b16 %v254, %v253
  %v283 = vpack.c.b16 %v256, %v255
  %v284 = vpack.c.b16 %v258, %v257
  %v285 = vpack.c.b16 %v260, %v259
  %v286 = vpack.c.b16 %v262, %v261
  %v287 = vpack.c.b16 %v264, %v263
  %v288 = vpack.c.b16 %v266, %v265
  %v289 = vpack.c.b16 %v268, %v267
  %v290 = vpack.c.b16 %v270, %v269
  %v291 = vpack.c.b16 %v272, %v271
  %v292 = vpack.c.b16 %v274, %v273
  %v293 = vpack.c.b16 %v276, %v275
  %v294 = vpack.c.b16 %v278, %v277
  %311 = vmatpush.bf16.msra.mxu0 %v286
  %312 = vmatpush.bf16.msra.mxu0 %v285
  %313 = vmatpush.bf16.msra.mxu0 %v284
  %314 = vmatpush.bf16.msra.mxu0 %v283
  %315 = vmatpush.bf16.msra.mxu0 %v282
  %316 = vmatpush.bf16.msra.mxu0 %v281
  %317 = vmatpush.bf16.msra.mxu0 %v280
  %318 = vmatpush.bf16.msra.mxu0 %v279
  %319 = vmatmul.bf16.gmra.mxu0 %v54
  %v320 = vpop.f32.mrf.mxu0
  %v321 = vadd.f32 0.0, %v320
  %v322 = vpop.f32.mrf.mxu0
  %v323 = vadd.f32 0.0, %v322
  %324 = vdwg.mxu0
  %325 = vmatpush.bf16.msra.mxu0 %v294
  %326 = vmatpush.bf16.msra.mxu0 %v293
  %327 = vmatpush.bf16.msra.mxu0 %v292
  %328 = vmatpush.bf16.msra.mxu0 %v291
  %329 = vmatpush.bf16.msra.mxu0 %v290
  %330 = vmatpush.bf16.msra.mxu0 %v289
  %331 = vmatpush.bf16.msra.mxu0 %v288
  %332 = vmatpush.bf16.msra.mxu0 %v287
  %333 = vmatmul.bf16.gmra.mxu0 %v55
  %v334 = vpop.f32.mrf.mxu0
  %v335 = vadd.f32 %v321, %v334
  %v336 = vpop.f32.mrf.mxu0
  %v337 = vadd.f32 %v323, %v336
  %338 = vdwg.mxu0
  %v339 = vmax.f32 %v178, %v335
  %v340 = vmax.f32 %v180, %v337
  %s341 = scalar_lea.vmem %s0, 256
  %v342 = vld [vmem:[%s341] sm:$0xf]
  %v343 = vld [vmem:[%s341 + $0x4] sm:$0xf]
  %v344 = vld [vmem:[%s341 + $0x8] sm:$0xf]
  %v345 = vld [vmem:[%s341 + $0xc] sm:$0xf]
  %v346 = vld [vmem:[%s341 + $0x10] sm:$0xf]
  %v347 = vld [vmem:[%s341 + $0x14] sm:$0xf]
  %v348 = vld [vmem:[%s341 + $0x18] sm:$0xf]
  %v349 = vld [vmem:[%s341 + $0x1c] sm:$0xf]
  %v350 = vld [vmem:[%s341 + $0x20] sm:$0xf]
  %v351 = vld [vmem:[%s341 + $0x24] sm:$0xf]
  %v352 = vld [vmem:[%s341 + $0x28] sm:$0xf]
  %v353 = vld [vmem:[%s341 + $0x2c] sm:$0xf]
  %v354 = vld [vmem:[%s341 + $0x30] sm:$0xf]
  %v355 = vld [vmem:[%s341 + $0x34] sm:$0xf]
  %v356 = vld [vmem:[%s341 + $0x38] sm:$0xf]
  %v357 = vld [vmem:[%s341 + $0x3c] sm:$0xf]
  %v358 = vld [vmem:[%s341 + $0x40] sm:$0xf]
  %v359 = vld [vmem:[%s341 + $0x44] sm:$0xf]
  %v360 = vld [vmem:[%s341 + $0x48] sm:$0xf]
  %v361 = vld [vmem:[%s341 + $0x4c] sm:$0xf]
  %v362 = vld [vmem:[%s341 + $0x50] sm:$0xf]
  %v363 = vld [vmem:[%s341 + $0x54] sm:$0xf]
  %v364 = vld [vmem:[%s341 + $0x58] sm:$0xf]
  %v365 = vld [vmem:[%s341 + $0x5c] sm:$0xf]
  %v366 = vld [vmem:[%s341 + $0x60] sm:$0xf]
  %v367 = vld [vmem:[%s341 + $0x64] sm:$0xf]
  %v368 = vld [vmem:[%s341 + $0x68] sm:$0xf]
  %v369 = vld [vmem:[%s341 + $0x6c] sm:$0xf]
  %v370 = vld [vmem:[%s341 + $0x70] sm:$0xf]
  %v371 = vld [vmem:[%s341 + $0x74] sm:$0xf]
  %v372 = vld [vmem:[%s341 + $0x78] sm:$0xf]
  %v373 = vld [vmem:[%s341 + $0x7c] sm:$0xf]
  %v406 = vunpack.c.l.b16 %v342
  %v407 = vunpack.c.l.b16 %v343
  %v408 = vunpack.c.l.b16 %v344
  %v409 = vunpack.c.l.b16 %v345
  %v410 = vunpack.c.l.b16 %v346
  %v411 = vunpack.c.l.b16 %v347
  %v412 = vunpack.c.l.b16 %v348
  %v413 = vunpack.c.l.b16 %v349
  %v414 = vunpack.c.l.b16 %v350
  %v415 = vunpack.c.l.b16 %v351
  %v416 = vunpack.c.l.b16 %v352
  %v417 = vunpack.c.l.b16 %v353
  %v418 = vunpack.c.l.b16 %v354
  %v419 = vunpack.c.l.b16 %v355
  %v420 = vunpack.c.l.b16 %v356
  %v421 = vunpack.c.l.b16 %v357
  %v422 = vunpack.c.l.b16 %v358
  %v423 = vunpack.c.l.b16 %v359
  %v424 = vunpack.c.l.b16 %v360
  %v425 = vunpack.c.l.b16 %v361
  %v426 = vunpack.c.l.b16 %v362
  %v427 = vunpack.c.l.b16 %v363
  %v428 = vunpack.c.l.b16 %v364
  %v429 = vunpack.c.l.b16 %v365
  %v430 = vunpack.c.l.b16 %v366
  %v431 = vunpack.c.l.b16 %v367
  %v432 = vunpack.c.l.b16 %v368
  %v433 = vunpack.c.l.b16 %v369
  %v434 = vunpack.c.l.b16 %v370
  %v435 = vunpack.c.l.b16 %v371
  %v436 = vunpack.c.l.b16 %v372
  %v437 = vunpack.c.l.b16 %v373
  %v438 = vpack.c.b16 %v407, %v406
  %v439 = vpack.c.b16 %v409, %v408
  %v440 = vpack.c.b16 %v411, %v410
  %v441 = vpack.c.b16 %v413, %v412
  %v442 = vpack.c.b16 %v415, %v414
  %v443 = vpack.c.b16 %v417, %v416
  %v444 = vpack.c.b16 %v419, %v418
  %v445 = vpack.c.b16 %v421, %v420
  %v446 = vpack.c.b16 %v423, %v422
  %v447 = vpack.c.b16 %v425, %v424
  %v448 = vpack.c.b16 %v427, %v426
  %v449 = vpack.c.b16 %v429, %v428
  %v450 = vpack.c.b16 %v431, %v430
  %v451 = vpack.c.b16 %v433, %v432
  %v452 = vpack.c.b16 %v435, %v434
  %v453 = vpack.c.b16 %v437, %v436
  %470 = vmatpush.bf16.msra.mxu0 %v445
  %471 = vmatpush.bf16.msra.mxu0 %v444
  %472 = vmatpush.bf16.msra.mxu0 %v443
  %473 = vmatpush.bf16.msra.mxu0 %v442
  %474 = vmatpush.bf16.msra.mxu0 %v441
  %475 = vmatpush.bf16.msra.mxu0 %v440
  %476 = vmatpush.bf16.msra.mxu0 %v439
  %477 = vmatpush.bf16.msra.mxu0 %v438
  %478 = vmatmul.bf16.gmra.mxu0 %v54
  %v479 = vpop.f32.mrf.mxu0
  %v480 = vadd.f32 0.0, %v479
  %v481 = vpop.f32.mrf.mxu0
  %v482 = vadd.f32 0.0, %v481
  %483 = vdwg.mxu0
  %484 = vmatpush.bf16.msra.mxu0 %v453
  %485 = vmatpush.bf16.msra.mxu0 %v452
  %486 = vmatpush.bf16.msra.mxu0 %v451
  %487 = vmatpush.bf16.msra.mxu0 %v450
  %488 = vmatpush.bf16.msra.mxu0 %v449
  %489 = vmatpush.bf16.msra.mxu0 %v448
  %490 = vmatpush.bf16.msra.mxu0 %v447
  %491 = vmatpush.bf16.msra.mxu0 %v446
  %492 = vmatmul.bf16.gmra.mxu0 %v55
  %v493 = vpop.f32.mrf.mxu0
  %v494 = vadd.f32 %v480, %v493
  %v495 = vpop.f32.mrf.mxu0
  %v496 = vadd.f32 %v482, %v495
  %497 = vdwg.mxu0
  %v498 = vmax.f32 %v339, %v494
  %v499 = vmax.f32 %v340, %v496
  %s500 = scalar_lea.vmem %s0, 384
  %v501 = vld [vmem:[%s500] sm:$0xf]
  %v502 = vld [vmem:[%s500 + $0x4] sm:$0xf]
  %v503 = vld [vmem:[%s500 + $0x8] sm:$0xf]
  %v504 = vld [vmem:[%s500 + $0xc] sm:$0xf]
  %v505 = vld [vmem:[%s500 + $0x10] sm:$0xf]
  %v506 = vld [vmem:[%s500 + $0x14] sm:$0xf]
  %v507 = vld [vmem:[%s500 + $0x18] sm:$0xf]
  %v508 = vld [vmem:[%s500 + $0x1c] sm:$0xf]
  %v509 = vld [vmem:[%s500 + $0x20] sm:$0xf]
  %v510 = vld [vmem:[%s500 + $0x24] sm:$0xf]
  %v511 = vld [vmem:[%s500 + $0x28] sm:$0xf]
  %v512 = vld [vmem:[%s500 + $0x2c] sm:$0xf]
  %v513 = vld [vmem:[%s500 + $0x30] sm:$0xf]
  %v514 = vld [vmem:[%s500 + $0x34] sm:$0xf]
  %v515 = vld [vmem:[%s500 + $0x38] sm:$0xf]
  %v516 = vld [vmem:[%s500 + $0x3c] sm:$0xf]
  %v517 = vld [vmem:[%s500 + $0x40] sm:$0xf]
  %v518 = vld [vmem:[%s500 + $0x44] sm:$0xf]
  %v519 = vld [vmem:[%s500 + $0x48] sm:$0xf]
  %v520 = vld [vmem:[%s500 + $0x4c] sm:$0xf]
  %v521 = vld [vmem:[%s500 + $0x50] sm:$0xf]
  %v522 = vld [vmem:[%s500 + $0x54] sm:$0xf]
  %v523 = vld [vmem:[%s500 + $0x58] sm:$0xf]
  %v524 = vld [vmem:[%s500 + $0x5c] sm:$0xf]
  %v525 = vld [vmem:[%s500 + $0x60] sm:$0xf]
  %v526 = vld [vmem:[%s500 + $0x64] sm:$0xf]
  %v527 = vld [vmem:[%s500 + $0x68] sm:$0xf]
  %v528 = vld [vmem:[%s500 + $0x6c] sm:$0xf]
  %v529 = vld [vmem:[%s500 + $0x70] sm:$0xf]
  %v530 = vld [vmem:[%s500 + $0x74] sm:$0xf]
  %v531 = vld [vmem:[%s500 + $0x78] sm:$0xf]
  %v532 = vld [vmem:[%s500 + $0x7c] sm:$0xf]
  %v565 = vunpack.c.l.b16 %v501
  %v566 = vunpack.c.l.b16 %v502
  %v567 = vunpack.c.l.b16 %v503
  %v568 = vunpack.c.l.b16 %v504
  %v569 = vunpack.c.l.b16 %v505
  %v570 = vunpack.c.l.b16 %v506
  %v571 = vunpack.c.l.b16 %v507
  %v572 = vunpack.c.l.b16 %v508
  %v573 = vunpack.c.l.b16 %v509
  %v574 = vunpack.c.l.b16 %v510
  %v575 = vunpack.c.l.b16 %v511
  %v576 = vunpack.c.l.b16 %v512
  %v577 = vunpack.c.l.b16 %v513
  %v578 = vunpack.c.l.b16 %v514
  %v579 = vunpack.c.l.b16 %v515
  %v580 = vunpack.c.l.b16 %v516
  %v581 = vunpack.c.l.b16 %v517
  %v582 = vunpack.c.l.b16 %v518
  %v583 = vunpack.c.l.b16 %v519
  %v584 = vunpack.c.l.b16 %v520
  %v585 = vunpack.c.l.b16 %v521
  %v586 = vunpack.c.l.b16 %v522
  %v587 = vunpack.c.l.b16 %v523
  %v588 = vunpack.c.l.b16 %v524
  %v589 = vunpack.c.l.b16 %v525
  %v590 = vunpack.c.l.b16 %v526
  %v591 = vunpack.c.l.b16 %v527
  %v592 = vunpack.c.l.b16 %v528
  %v593 = vunpack.c.l.b16 %v529
  %v594 = vunpack.c.l.b16 %v530
  %v595 = vunpack.c.l.b16 %v531
  %v596 = vunpack.c.l.b16 %v532
  %v597 = vpack.c.b16 %v566, %v565
  %v598 = vpack.c.b16 %v568, %v567
  %v599 = vpack.c.b16 %v570, %v569
  %v600 = vpack.c.b16 %v572, %v571
  %v601 = vpack.c.b16 %v574, %v573
  %v602 = vpack.c.b16 %v576, %v575
  %v603 = vpack.c.b16 %v578, %v577
  %v604 = vpack.c.b16 %v580, %v579
  %v605 = vpack.c.b16 %v582, %v581
  %v606 = vpack.c.b16 %v584, %v583
  %v607 = vpack.c.b16 %v586, %v585
  %v608 = vpack.c.b16 %v588, %v587
  %v609 = vpack.c.b16 %v590, %v589
  %v610 = vpack.c.b16 %v592, %v591
  %v611 = vpack.c.b16 %v594, %v593
  %v612 = vpack.c.b16 %v596, %v595
  %629 = vmatpush.bf16.msra.mxu0 %v604
  %630 = vmatpush.bf16.msra.mxu0 %v603
  %631 = vmatpush.bf16.msra.mxu0 %v602
  %632 = vmatpush.bf16.msra.mxu0 %v601
  %633 = vmatpush.bf16.msra.mxu0 %v600
  %634 = vmatpush.bf16.msra.mxu0 %v599
  %635 = vmatpush.bf16.msra.mxu0 %v598
  %636 = vmatpush.bf16.msra.mxu0 %v597
  %637 = vmatmul.bf16.gmra.mxu0 %v54
  %v638 = vpop.f32.mrf.mxu0
  %v639 = vadd.f32 0.0, %v638
  %v640 = vpop.f32.mrf.mxu0
  %v641 = vadd.f32 0.0, %v640
  %642 = vdwg.mxu0
  %643 = vmatpush.bf16.msra.mxu0 %v612
  %644 = vmatpush.bf16.msra.mxu0 %v611
  %645 = vmatpush.bf16.msra.mxu0 %v610
  %646 = vmatpush.bf16.msra.mxu0 %v609
  %647 = vmatpush.bf16.msra.mxu0 %v608
  %648 = vmatpush.bf16.msra.mxu0 %v607
  %649 = vmatpush.bf16.msra.mxu0 %v606
  %650 = vmatpush.bf16.msra.mxu0 %v605
  %651 = vmatmul.bf16.gmra.mxu0 %v55
  %v652 = vpop.f32.mrf.mxu0
  %v653 = vadd.f32 %v639, %v652
  %v654 = vpop.f32.mrf.mxu0
  %v655 = vadd.f32 %v641, %v654
  %656 = vdwg.mxu0
  %v657 = vmax.f32 %v498, %v653
  %v658 = vmax.f32 %v499, %v655
  %v659 = vld [vmem:[%s2] sm:$0xff]
  %v660 = vld [vmem:[%s2 + $0x8] sm:$0xff]
  %662 = vset.pattern.permute.xlu0 0
  %663 = vperm.xlu0 %662, %v659
  %v664 = vpop.permute.xlu0 %663
  %667 = vset.pattern.permute.xlu0 0
  %668 = vperm.xlu0 %667, %v660
  %v669 = vpop.permute.xlu0 %668
  %v671 = vadd.f32 %v657, %v664
  %v672 = vadd.f32 %v658, %v669
  %v673 = vmax.f32 %v671, 0.0
  %v674 = vmax.f32 %v672, 0.0
  %675 = vst [vmem:[%s3] sm:$0xff] %v673
  %676 = vst [vmem:[%s3 + $0x8] sm:$0xff] %v674
  // Predicated region
  $region14: #{cnn_forward.4} parent=0 // pred_check
    _
  $region15: #{cnn_forward.4} parent=0 // pred_check_branch
    %678 = sbr.rel (0) target = $region17
  $region16: #{cnn_forward.4} parent=0 // pred_region
    _
  $region17: #{cnn_forward.4} parent=0 // pred_fallthru
    _
  // Predicated region
  $region18: #{cnn_forward.4} parent=0 // pred_check
    _
  $region19: #{cnn_forward.4} parent=0 // pred_check_branch
    %680 = sbr.rel (0) target = $region21
  $region20: #{cnn_forward.4} parent=0 // pred_region
    _
  $region21: #{cnn_forward.4} parent=0 // pred_fallthru
    _

// kernel: cnn_forward.5
$region0: #{cnn_forward.5}
  #allocation0 [shape = 'u32[]', space=smem, size = 0x4, offset = 0x4, fixed_abs, tag = 'smem constant byte address 0x4 - core index']
  #allocation1 [shape = 'u32[72,128]{1,0:T(1,128)}', space=vmem, size = 0x9000, scoped, tag = 'internal scratch']
  %s0 = inlined_call_operand.vmem [shape: f32[8,512], index: 0, kind: input, shape index: {}]
  %s1 = inlined_call_operand.vmem [shape: bf16[512,128], index: 1, kind: input, shape index: {}]
  %s2 = inlined_call_operand.vmem [shape: f32[1,128], index: 2, kind: input, shape index: {}]
  %s3 = inlined_call_operand.vmem [shape: bf16[128,128], index: 3, kind: input, shape index: {}]
  %s4 = inlined_call_operand.vmem [shape: f32[1,128], index: 4, kind: input, shape index: {}]
  %s5 = inlined_call_operand.vmem [shape: bf16[128,128], index: 5, kind: input, shape index: {}]
  %s6 = inlined_call_operand.vmem [shape: f32[1,128], index: 6, kind: input, shape index: {}]
  %s7 = inlined_call_operand.vmem [shape: f32[8,128], index: 7, kind: output, shape index: {}]
  %s8 = sld [smem:[#allocation0]]
  $region38: #{cnn_forward.5} parent=0
    _
  %s10 = ssub.s32 1, %s8
  %s11 = scalar_select 0, %s10, %s8
  // Predicated region
  $region2: #{cnn_forward.5} parent=0 // pred_check
    _
  $region3: #{cnn_forward.5} parent=0 // pred_check_branch
    %13 = sbr.rel (0) target = $region5
  $region4: #{cnn_forward.5} parent=0 // pred_region
    _
  $region5: #{cnn_forward.5} parent=0 // pred_fallthru
    _
  // Predicated region
  $region6: #{cnn_forward.5} parent=0 // pred_check
    _
  $region7: #{cnn_forward.5} parent=0 // pred_check_branch
    %15 = sbr.rel (0) target = $region9
  $region8: #{cnn_forward.5} parent=0 // pred_region
    _
  $region9: #{cnn_forward.5} parent=0 // pred_fallthru
    _
  // Predicated region
  $region10: #{cnn_forward.5} parent=0 // pred_check
    _
  $region11: #{cnn_forward.5} parent=0 // pred_check_branch
    %17 = sbr.rel (0) target = $region13
  $region12: #{cnn_forward.5} parent=0 // pred_region
    _
  $region13: #{cnn_forward.5} parent=0 // pred_fallthru
    _
  // Predicated region
  $region14: #{cnn_forward.5} parent=0 // pred_check
    _
  $region15: #{cnn_forward.5} parent=0 // pred_check_branch
    %19 = sbr.rel (0) target = $region17
  $region16: #{cnn_forward.5} parent=0 // pred_region
    _
  $region17: #{cnn_forward.5} parent=0 // pred_fallthru
    _
  // Predicated region
  $region18: #{cnn_forward.5} parent=0 // pred_check
    _
  $region19: #{cnn_forward.5} parent=0 // pred_check_branch
    %21 = sbr.rel (0) target = $region21
  $region20: #{cnn_forward.5} parent=0 // pred_region
    _
  $region21: #{cnn_forward.5} parent=0 // pred_fallthru
    _
  // Predicated region
  $region22: #{cnn_forward.5} parent=0 // pred_check
    _
  $region23: #{cnn_forward.5} parent=0 // pred_check_branch
    %23 = sbr.rel (0) target = $region25
  $region24: #{cnn_forward.5} parent=0 // pred_region
    _
  $region25: #{cnn_forward.5} parent=0 // pred_fallthru
    _
  // Predicated region
  $region26: #{cnn_forward.5} parent=0 // pred_check
    _
  $region27: #{cnn_forward.5} parent=0 // pred_check_branch
    %25 = sbr.rel (0) target = $region29
  $region28: #{cnn_forward.5} parent=0 // pred_region
    _
  $region29: #{cnn_forward.5} parent=0 // pred_fallthru
    _
  %v26 = vld [vmem:[%s0] sm:$0xff]
  %v27 = vld [vmem:[%s0 + $0x8] sm:$0xff]
  %v28 = vld [vmem:[%s0 + $0x10] sm:$0xff]
  %v29 = vld [vmem:[%s0 + $0x18] sm:$0xff]
  %v30 = vpack.c.bf16 %v26, %v26
  %v31 = vpack.c.bf16 %v27, %v27
  %v32 = vpack.c.bf16 %v28, %v28
  %v33 = vpack.c.bf16 %v29, %v29
  %v34 = vld [vmem:[%s1] sm:$0xf]
  %v35 = vld [vmem:[%s1 + $0x4] sm:$0xf]
  %v36 = vld [vmem:[%s1 + $0x8] sm:$0xf]
  %v37 = vld [vmem:[%s1 + $0xc] sm:$0xf]
  %v38 = vld [vmem:[%s1 + $0x10] sm:$0xf]
  %v39 = vld [vmem:[%s1 + $0x14] sm:$0xf]
  %v40 = vld [vmem:[%s1 + $0x18] sm:$0xf]
  %v41 = vld [vmem:[%s1 + $0x1c] sm:$0xf]
  %v42 = vld [vmem:[%s1 + $0x20] sm:$0xf]
  %v43 = vld [vmem:[%s1 + $0x24] sm:$0xf]
  %v44 = vld [vmem:[%s1 + $0x28] sm:$0xf]
  %v45 = vld [vmem:[%s1 + $0x2c] sm:$0xf]
  %v46 = vld [vmem:[%s1 + $0x30] sm:$0xf]
  %v47 = vld [vmem:[%s1 + $0x34] sm:$0xf]
  %v48 = vld [vmem:[%s1 + $0x38] sm:$0xf]
  %v49 = vld [vmem:[%s1 + $0x3c] sm:$0xf]
  %v50 = vld [vmem:[%s1 + $0x40] sm:$0xf]
  %v51 = vld [vmem:[%s1 + $0x44] sm:$0xf]
  %v52 = vld [vmem:[%s1 + $0x48] sm:$0xf]
  %v53 = vld [vmem:[%s1 + $0x4c] sm:$0xf]
  %v54 = vld [vmem:[%s1 + $0x50] sm:$0xf]
  %v55 = vld [vmem:[%s1 + $0x54] sm:$0xf]
  %v56 = vld [vmem:[%s1 + $0x58] sm:$0xf]
  %v57 = vld [vmem:[%s1 + $0x5c] sm:$0xf]
  %v58 = vld [vmem:[%s1 + $0x60] sm:$0xf]
  %v59 = vld [vmem:[%s1 + $0x64] sm:$0xf]
  %v60 = vld [vmem:[%s1 + $0x68] sm:$0xf]
  %v61 = vld [vmem:[%s1 + $0x6c] sm:$0xf]
  %v62 = vld [vmem:[%s1 + $0x70] sm:$0xf]
  %v63 = vld [vmem:[%s1 + $0x74] sm:$0xf]
  %v64 = vld [vmem:[%s1 + $0x78] sm:$0xf]
  %v65 = vld [vmem:[%s1 + $0x7c] sm:$0xf]
  %v66 = vld [vmem:[%s1 + $0x80] sm:$0xf]
  %v67 = vld [vmem:[%s1 + $0x84] sm:$0xf]
  %v68 = vld [vmem:[%s1 + $0x88] sm:$0xf]
  %v69 = vld [vmem:[%s1 + $0x8c] sm:$0xf]
  %v70 = vld [vmem:[%s1 + $0x90] sm:$0xf]
  %v71 = vld [vmem:[%s1 + $0x94] sm:$0xf]
  %v72 = vld [vmem:[%s1 + $0x98] sm:$0xf]
  %v73 = vld [vmem:[%s1 + $0x9c] sm:$0xf]
  %v74 = vld [vmem:[%s1 + $0xa0] sm:$0xf]
  %v75 = vld [vmem:[%s1 + $0xa4] sm:$0xf]
  %v76 = vld [vmem:[%s1 + $0xa8] sm:$0xf]
  %v77 = vld [vmem:[%s1 + $0xac] sm:$0xf]
  %v78 = vld [vmem:[%s1 + $0xb0] sm:$0xf]
  %v79 = vld [vmem:[%s1 + $0xb4] sm:$0xf]
  %v80 = vld [vmem:[%s1 + $0xb8] sm:$0xf]
  %v81 = vld [vmem:[%s1 + $0xbc] sm:$0xf]
  %v82 = vld [vmem:[%s1 + $0xc0] sm:$0xf]
  %v83 = vld [vmem:[%s1 + $0xc4] sm:$0xf]
  %v84 = vld [vmem:[%s1 + $0xc8] sm:$0xf]
  %v85 = vld [vmem:[%s1 + $0xcc] sm:$0xf]
  %v86 = vld [vmem:[%s1 + $0xd0] sm:$0xf]
  %v87 = vld [vmem:[%s1 + $0xd4] sm:$0xf]
  %v88 = vld [vmem:[%s1 + $0xd8] sm:$0xf]
  %v89 = vld [vmem:[%s1 + $0xdc] sm:$0xf]
  %v90 = vld [vmem:[%s1 + $0xe0] sm:$0xf]
  %v91 = vld [vmem:[%s1 + $0xe4] sm:$0xf]
  %v92 = vld [vmem:[%s1 + $0xe8] sm:$0xf]
  %v93 = vld [vmem:[%s1 + $0xec] sm:$0xf]
  %v94 = vld [vmem:[%s1 + $0xf0] sm:$0xf]
  %v95 = vld [vmem:[%s1 + $0xf4] sm:$0xf]
  %v96 = vld [vmem:[%s1 + $0xf8] sm:$0xf]
  %v97 = vld [vmem:[%s1 + $0xfc] sm:$0xf]
  %v98 = vld [vmem:[%s2] sm:$0x1]
  %v100 = vperm.slane %v98, 0
  %v166 = vunpack.c.l.b16 %v34
  %v167 = vunpack.c.l.b16 %v35
  %v168 = vunpack.c.l.b16 %v36
  %v169 = vunpack.c.l.b16 %v37
  %v170 = vunpack.c.l.b16 %v38
  %v171 = vunpack.c.l.b16 %v39
  %v172 = vunpack.c.l.b16 %v40
  %v173 = vunpack.c.l.b16 %v41
  %v174 = vunpack.c.l.b16 %v42
  %v175 = vunpack.c.l.b16 %v43
  %v176 = vunpack.c.l.b16 %v44
  %v177 = vunpack.c.l.b16 %v45
  %v178 = vunpack.c.l.b16 %v46
  %v179 = vunpack.c.l.b16 %v47
  %v180 = vunpack.c.l.b16 %v48
  %v181 = vunpack.c.l.b16 %v49
  %v182 = vunpack.c.l.b16 %v50
  %v183 = vunpack.c.l.b16 %v51
  %v184 = vunpack.c.l.b16 %v52
  %v185 = vunpack.c.l.b16 %v53
  %v186 = vunpack.c.l.b16 %v54
  %v187 = vunpack.c.l.b16 %v55
  %v188 = vunpack.c.l.b16 %v56
  %v189 = vunpack.c.l.b16 %v57
  %v190 = vunpack.c.l.b16 %v58
  %v191 = vunpack.c.l.b16 %v59
  %v192 = vunpack.c.l.b16 %v60
  %v193 = vunpack.c.l.b16 %v61
  %v194 = vunpack.c.l.b16 %v62
  %v195 = vunpack.c.l.b16 %v63
  %v196 = vunpack.c.l.b16 %v64
  %v197 = vunpack.c.l.b16 %v65
  %v198 = vunpack.c.l.b16 %v66
  %v199 = vunpack.c.l.b16 %v67
  %v200 = vunpack.c.l.b16 %v68
  %v201 = vunpack.c.l.b16 %v69
  %v202 = vunpack.c.l.b16 %v70
  %v203 = vunpack.c.l.b16 %v71
  %v204 = vunpack.c.l.b16 %v72
  %v205 = vunpack.c.l.b16 %v73
  %v206 = vunpack.c.l.b16 %v74
  %v207 = vunpack.c.l.b16 %v75
  %v208 = vunpack.c.l.b16 %v76
  %v209 = vunpack.c.l.b16 %v77
  %v210 = vunpack.c.l.b16 %v78
  %v211 = vunpack.c.l.b16 %v79
  %v212 = vunpack.c.l.b16 %v80
  %v213 = vunpack.c.l.b16 %v81
  %v214 = vunpack.c.l.b16 %v82
  %v215 = vunpack.c.l.b16 %v83
  %v216 = vunpack.c.l.b16 %v84
  %v217 = vunpack.c.l.b16 %v85
  %v218 = vunpack.c.l.b16 %v86
  %v219 = vunpack.c.l.b16 %v87
  %v220 = vunpack.c.l.b16 %v88
  %v221 = vunpack.c.l.b16 %v89
  %v222 = vunpack.c.l.b16 %v90
  %v223 = vunpack.c.l.b16 %v91
  %v224 = vunpack.c.l.b16 %v92
  %v225 = vunpack.c.l.b16 %v93
  %v226 = vunpack.c.l.b16 %v94
  %v227 = vunpack.c.l.b16 %v95
  %v228 = vunpack.c.l.b16 %v96
  %v229 = vunpack.c.l.b16 %v97
  %v230 = vpack.c.b16 %v167, %v166
  %v231 = vpack.c.b16 %v169, %v168
  %v232 = vpack.c.b16 %v171, %v170
  %v233 = vpack.c.b16 %v173, %v172
  %v234 = vpack.c.b16 %v175, %v174
  %v235 = vpack.c.b16 %v177, %v176
  %v236 = vpack.c.b16 %v179, %v178
  %v237 = vpack.c.b16 %v181, %v180
  %v238 = vpack.c.b16 %v183, %v182
  %v239 = vpack.c.b16 %v185, %v184
  %v240 = vpack.c.b16 %v187, %v186
  %v241 = vpack.c.b16 %v189, %v188
  %v242 = vpack.c.b16 %v191, %v190
  %v243 = vpack.c.b16 %v193, %v192
  %v244 = vpack.c.b16 %v195, %v194
  %v245 = vpack.c.b16 %v197, %v196
  %v246 = vpack.c.b16 %v199, %v198
  %v247 = vpack.c.b16 %v201, %v200
  %v248 = vpack.c.b16 %v203, %v202
  %v249 = vpack.c.b16 %v205, %v204
  %v250 = vpack.c.b16 %v207, %v206
  %v251 = vpack.c.b16 %v209, %v208
  %v252 = vpack.c.b16 %v211, %v210
  %v253 = vpack.c.b16 %v213, %v212
  %v254 = vpack.c.b16 %v215, %v214
  %v255 = vpack.c.b16 %v217, %v216
  %v256 = vpack.c.b16 %v219, %v218
  %v257 = vpack.c.b16 %v221, %v220
  %v258 = vpack.c.b16 %v223, %v222
  %v259 = vpack.c.b16 %v225, %v224
  %v260 = vpack.c.b16 %v227, %v226
  %v261 = vpack.c.b16 %v229, %v228
  %294 = vmatpush.bf16.msra.mxu0 %v237
  %295 = vmatpush.bf16.msra.mxu0 %v236
  %296 = vmatpush.bf16.msra.mxu0 %v235
  %297 = vmatpush.bf16.msra.mxu0 %v234
  %298 = vmatpush.bf16.msra.mxu0 %v233
  %299 = vmatpush.bf16.msra.mxu0 %v232
  %300 = vmatpush.bf16.msra.mxu0 %v231
  %301 = vmatpush.bf16.msra.mxu0 %v230
  %302 = vmatmul.bf16.gmra.mxu0 %v30
  %v303 = vpop.f32.mrf.mxu0
  %v304 = vadd.f32 %v100, %v303
  %v305 = vpop.f32.mrf.mxu0
  %306 = vdwg.mxu0
  %307 = vmatpush.bf16.msra.mxu0 %v245
  %308 = vmatpush.bf16.msra.mxu0 %v244
  %309 = vmatpush.bf16.msra.mxu0 %v243
  %310 = vmatpush.bf16.msra.mxu0 %v242
  %311 = vmatpush.bf16.msra.mxu0 %v241
  %312 = vmatpush.bf16.msra.mxu0 %v240
  %313 = vmatpush.bf16.msra.mxu0 %v239
  %314 = vmatpush.bf16.msra.mxu0 %v238
  %315 = vmatmul.bf16.gmra.mxu0 %v31
  %v316 = vpop.f32.mrf.mxu0
  %v317 = vadd.f32 %v304, %v316
  %v318 = vpop.f32.mrf.mxu0
  %319 = vdwg.mxu0
  %320 = vmatpush.bf16.msra.mxu0 %v253
  %321 = vmatpush.bf16.msra.mxu0 %v252
  %322 = vmatpush.bf16.msra.mxu0 %v251
  %323 = vmatpush.bf16.msra.mxu0 %v250
  %324 = vmatpush.bf16.msra.mxu0 %v249
  %325 = vmatpush.bf16.msra.mxu0 %v248
  %326 = vmatpush.bf16.msra.mxu0 %v247
  %327 = vmatpush.bf16.msra.mxu0 %v246
  %328 = vmatmul.bf16.gmra.mxu0 %v32
  %v329 = vpop.f32.mrf.mxu0
  %v330 = vadd.f32 %v317, %v329
  %v331 = vpop.f32.mrf.mxu0
  %332 = vdwg.mxu0
  %333 = vmatpush.bf16.msra.mxu0 %v261
  %334 = vmatpush.bf16.msra.mxu0 %v260
  %335 = vmatpush.bf16.msra.mxu0 %v259
  %336 = vmatpush.bf16.msra.mxu0 %v258
  %337 = vmatpush.bf16.msra.mxu0 %v257
  %338 = vmatpush.bf16.msra.mxu0 %v256
  %339 = vmatpush.bf16.msra.mxu0 %v255
  %340 = vmatpush.bf16.msra.mxu0 %v254
  %341 = vmatmul.bf16.gmra.mxu0 %v33
  %v342 = vpop.f32.mrf.mxu0
  %v343 = vadd.f32 %v330, %v342
  %v344 = vpop.f32.mrf.mxu0
  %345 = vdwg.mxu0
  %v346 = vmax.f32 %v343, 0.0
  %v347 = vpack.c.bf16 %v346, %v346
  %v348 = vld [vmem:[%s3] sm:$0xf]
  %v349 = vld [vmem:[%s3 + $0x4] sm:$0xf]
  %v350 = vld [vmem:[%s3 + $0x8] sm:$0xf]
  %v351 = vld [vmem:[%s3 + $0xc] sm:$0xf]
  %v352 = vld [vmem:[%s3 + $0x10] sm:$0xf]
  %v353 = vld [vmem:[%s3 + $0x14] sm:$0xf]
  %v354 = vld [vmem:[%s3 + $0x18] sm:$0xf]
  %v355 = vld [vmem:[%s3 + $0x1c] sm:$0xf]
  %v356 = vld [vmem:[%s3 + $0x20] sm:$0xf]
  %v357 = vld [vmem:[%s3 + $0x24] sm:$0xf]
  %v358 = vld [vmem:[%s3 + $0x28] sm:$0xf]
  %v359 = vld [vmem:[%s3 + $0x2c] sm:$0xf]
  %v360 = vld [vmem:[%s3 + $0x30] sm:$0xf]
  %v361 = vld [vmem:[%s3 + $0x34] sm:$0xf]
  %v362 = vld [vmem:[%s3 + $0x38] sm:$0xf]
  %v363 = vld [vmem:[%s3 + $0x3c] sm:$0xf]
  %v364 = vld [vmem:[%s4] sm:$0x1]
  %v366 = vperm.slane %v364, 0
  %v384 = vunpack.c.l.b16 %v348
  %v385 = vunpack.c.l.b16 %v349
  %v386 = vunpack.c.l.b16 %v350
  %v387 = vunpack.c.l.b16 %v351
  %v388 = vunpack.c.l.b16 %v352
  %v389 = vunpack.c.l.b16 %v353
  %v390 = vunpack.c.l.b16 %v354
  %v391 = vunpack.c.l.b16 %v355
  %v392 = vunpack.c.l.b16 %v356
  %v393 = vunpack.c.l.b16 %v357
  %v394 = vunpack.c.l.b16 %v358
  %v395 = vunpack.c.l.b16 %v359
  %v396 = vunpack.c.l.b16 %v360
  %v397 = vunpack.c.l.b16 %v361
  %v398 = vunpack.c.l.b16 %v362
  %v399 = vunpack.c.l.b16 %v363
  %v400 = vpack.c.b16 %v385, %v384
  %v401 = vpack.c.b16 %v387, %v386
  %v402 = vpack.c.b16 %v389, %v388
  %v403 = vpack.c.b16 %v391, %v390
  %v404 = vpack.c.b16 %v393, %v392
  %v405 = vpack.c.b16 %v395, %v394
  %v406 = vpack.c.b16 %v397, %v396
  %v407 = vpack.c.b16 %v399, %v398
  %416 = vmatpush.bf16.msra.mxu0 %v407
  %417 = vmatpush.bf16.msra.mxu0 %v406
  %418 = vmatpush.bf16.msra.mxu0 %v405
  %419 = vmatpush.bf16.msra.mxu0 %v404
  %420 = vmatpush.bf16.msra.mxu0 %v403
  %421 = vmatpush.bf16.msra.mxu0 %v402
  %422 = vmatpush.bf16.msra.mxu0 %v401
  %423 = vmatpush.bf16.msra.mxu0 %v400
  %424 = vmatmul.bf16.gmra.mxu0 %v347
  %v425 = vpop.f32.mrf.mxu0
  %v426 = vadd.f32 %v366, %v425
  %v427 = vpop.f32.mrf.mxu0
  %428 = vdwg.mxu0
  %v429 = vmax.f32 %v426, 0.0
  %v430 = vpack.c.bf16 %v429, %v429
  %v431 = vld [vmem:[%s5] sm:$0xf]
  %v432 = vld [vmem:[%s5 + $0x4] sm:$0xf]
  %v433 = vld [vmem:[%s5 + $0x8] sm:$0xf]
  %v434 = vld [vmem:[%s5 + $0xc] sm:$0xf]
  %v435 = vld [vmem:[%s5 + $0x10] sm:$0xf]
  %v436 = vld [vmem:[%s5 + $0x14] sm:$0xf]
  %v437 = vld [vmem:[%s5 + $0x18] sm:$0xf]
  %v438 = vld [vmem:[%s5 + $0x1c] sm:$0xf]
  %v439 = vld [vmem:[%s5 + $0x20] sm:$0xf]
  %v440 = vld [vmem:[%s5 + $0x24] sm:$0xf]
  %v441 = vld [vmem:[%s5 + $0x28] sm:$0xf]
  %v442 = vld [vmem:[%s5 + $0x2c] sm:$0xf]
  %v443 = vld [vmem:[%s5 + $0x30] sm:$0xf]
  %v444 = vld [vmem:[%s5 + $0x34] sm:$0xf]
  %v445 = vld [vmem:[%s5 + $0x38] sm:$0xf]
  %v446 = vld [vmem:[%s5 + $0x3c] sm:$0xf]
  %v447 = vld [vmem:[%s6] sm:$0x1]
  %v449 = vperm.slane %v447, 0
  %v467 = vunpack.c.l.b16 %v431
  %v468 = vunpack.c.l.b16 %v432
  %v469 = vunpack.c.l.b16 %v433
  %v470 = vunpack.c.l.b16 %v434
  %v471 = vunpack.c.l.b16 %v435
  %v472 = vunpack.c.l.b16 %v436
  %v473 = vunpack.c.l.b16 %v437
  %v474 = vunpack.c.l.b16 %v438
  %v475 = vunpack.c.l.b16 %v439
  %v476 = vunpack.c.l.b16 %v440
  %v477 = vunpack.c.l.b16 %v441
  %v478 = vunpack.c.l.b16 %v442
  %v479 = vunpack.c.l.b16 %v443
  %v480 = vunpack.c.l.b16 %v444
  %v481 = vunpack.c.l.b16 %v445
  %v482 = vunpack.c.l.b16 %v446
  %v483 = vpack.c.b16 %v468, %v467
  %v484 = vpack.c.b16 %v470, %v469
  %v485 = vpack.c.b16 %v472, %v471
  %v486 = vpack.c.b16 %v474, %v473
  %v487 = vpack.c.b16 %v476, %v475
  %v488 = vpack.c.b16 %v478, %v477
  %v489 = vpack.c.b16 %v480, %v479
  %v490 = vpack.c.b16 %v482, %v481
  %499 = vmatpush.bf16.msra.mxu0 %v490
  %500 = vmatpush.bf16.msra.mxu0 %v489
  %501 = vmatpush.bf16.msra.mxu0 %v488
  %502 = vmatpush.bf16.msra.mxu0 %v487
  %503 = vmatpush.bf16.msra.mxu0 %v486
  %504 = vmatpush.bf16.msra.mxu0 %v485
  %505 = vmatpush.bf16.msra.mxu0 %v484
  %506 = vmatpush.bf16.msra.mxu0 %v483
  %507 = vmatmul.bf16.gmra.mxu0 %v430
  %v508 = vpop.f32.mrf.mxu0
  %v509 = vadd.f32 %v449, %v508
  %v510 = vpop.f32.mrf.mxu0
  %511 = vdwg.mxu0
  %512 = vst [vmem:[%s7] sm:$0xff] %v509
  // Predicated region
  $region30: #{cnn_forward.5} parent=0 // pred_check
    _
  $region31: #{cnn_forward.5} parent=0 // pred_check_branch
    %514 = sbr.rel (0) target = $region33
  $region32: #{cnn_forward.5} parent=0 // pred_region
    _
  $region33: #{cnn_forward.5} parent=0 // pred_fallthru
    _
  // Predicated region
  $region34: #{cnn_forward.5} parent=0 // pred_check
    _
  $region35: #{cnn_forward.5} parent=0 // pred_check_branch
    %516 = sbr.rel (0) target = $region37
  $region36: #{cnn_forward.5} parent=0 // pred_region
    _
  $region37: #{cnn_forward.5} parent=0 // pred_fallthru
    _

</llo_original>
